<compile_context>
chip_gen: v5e
topology: v5e:2x2
jax: 0.10.0
libtpu: 0.0.40
codegen_flags: <defaults>
</compile_context>

<pallas_src>
import numpy as np
import jax
import jax.numpy as jnp
from jax import lax
from jax.experimental import pallas as pl
from jax.experimental.pallas import tpu as pltpu


# ----------------------------------------------------------------------------
# Fused kernel: upconv (k=2,s=2) -> conv3x3+BN+LReLU -> conv3x3+BN+LReLU
# Internal image layout: rows grouped by parity, one (H+1)-row window per image:
#   img_ref[parity, b, h'', col*Ci + ci]  ==  row-padded image b at padded row 2*h''+parity
# SAME column-padding lives in the band matrices (zero blocks), not in the scratch.
# ----------------------------------------------------------------------------
def _fused_up_kernel(x_ref, wup_ref, bup_ref, b1_ref, s1_ref, t1_ref,
                     b2_ref, s2_ref, t2_ref, o_ref, u_ref, z_ref):
    nb = u_ref.shape[1]                # images in this grid step
    H = u_ref.shape[2] - 1
    u_cols = u_ref.shape[3]
    z_cols = z_ref.shape[3]

    # Zero ONLY the never-written pad rows (everything else is fully rewritten each step).
    zu = jnp.zeros((1, u_cols), jnp.float32)
    zz = jnp.zeros((1, z_cols), jnp.float32)
    for b in range(nb):
        u_ref[0, b, 0:1, :] = zu            # padded row 0
        u_ref[1, b, H:H + 1, :] = zu        # padded row 2H+1
        z_ref[0, b, 0:1, :] = zz
        z_ref[1, b, H:H + 1, :] = zz

    x = x_ref[...]                          # (nb*H, W*Cin), lane-dense, all images stacked

    # ---- ConvTranspose2d(k=2, s=2): one banded matmul per output-row parity, M = nb*H ----
    # phase i produces upsampled rows 2h+i  ->  padded rows 2h+i+1
    for i in range(2):
        u = jnp.dot(x, wup_ref[i], preferred_element_type=jnp.float32) + bup_ref[...]
        plane, off = (i + 1) % 2, (i + 1) // 2
        for b in range(nb):
            u_ref[plane, b, off:off + H, :] = u[b * H:(b + 1) * H, :]

    # ---- banded conv3x3 + folded BN + LeakyReLU, per image / per output-row parity ----
    def conv_phase(img_ref, band_ref, s_ref, t_ref, b, a):
        acc = None
        for t in range(3):                  # t == kh
            r = a + t                       # padded input rows 2h + a + t
            tap = img_ref[r % 2, b, r // 2:r // 2 + H, :]
            d = jnp.dot(tap, band_ref[t], preferred_element_type=jnp.float32)
            acc = d if acc is None else acc + d
        y = acc * s_ref[...] + t_ref[...]   # folded conv-bias + BN (running stats)
        return jnp.where(y > 0, y, 0.01 * y)  # LeakyReLU(negative_slope=0.01)

    for b in range(nb):
        # conv1: output row 2h+a stored as padded row 2h+a+1 of the z scratch
        for a in range(2):
            plane, off = (a + 1) % 2, (a + 1) // 2
            z_ref[plane, b, off:off + H, :] = conv_phase(u_ref, b1_ref, s1_ref, t1_ref, b, a)
        # conv2: final output; phase e holds output rows 2h+e, 256-lane dense stores
        for e in range(2):
            o_ref[e, b * H:(b + 1) * H, :] = conv_phase(z_ref, b2_ref, s2_ref, t2_ref, b, e)


# ----------------------------------------------------------------------------
# Host-side weight packing (pure numpy, one-time)
# ----------------------------------------------------------------------------
def _pack_params(p, H, W, eps=1e-5):
    Cin, Cmid = p["w_up"].shape[0], p["w_up"].shape[1]
    W2 = 2 * W
    u_cols = W2 * Cmid

    # ConvTranspose2d bands, one per output-row parity: (2, W*Cin, W2*Cmid); no pad columns.
    w_up = np.asarray(p["w_up"], np.float32)
    wup = np.zeros((2, W * Cin, u_cols), np.float32)
    for i in range(2):
        for j in range(2):
            for w in range(W):
                wup[i, w * Cin:(w + 1) * Cin,
                    (2 * w + j) * Cmid:(2 * w + j + 1) * Cmid] = w_up[:, :, i, j]
    bup = np.tile(np.asarray(p["b_up"], np.float32), W2)[None, :]      # (1, W2*Cmid)

    # 3x3 conv band with SAME padding folded in as zero blocks:
    #   band[kh, (q+kw-1)*Ci + ci, q*Co + co] = w[co, ci, kh, kw]   (skip q+kw-1 outside [0,W2))
    def conv_band(w_conv):
        Co, Ci = w_conv.shape[0], w_conv.shape[1]
        w_np = np.asarray(w_conv, np.float32)
        band = np.zeros((3, W2 * Ci, W2 * Co), np.float32)
        for t in range(3):                  # kh
            for kw in range(3):
                blk = w_np[:, :, t, kw].T   # (Ci, Co)
                for q in range(W2):         # output column
                    src = q + kw - 1
                    if 0 <= src < W2:
                        band[t, src * Ci:(src + 1) * Ci, q * Co:(q + 1) * Co] = blk
        return band

    def bn_rows(b, g, be, m, v):
        scale = np.asarray(g, np.float32) / np.sqrt(np.asarray(v, np.float32) + eps)
        shift = (np.asarray(b, np.float32) - np.asarray(m, np.float32)) * scale \
                + np.asarray(be, np.float32)
        return np.tile(scale, W2)[None, :], np.tile(shift, W2)[None, :]

    band1 = conv_band(p["w1"])
    s1, t1 = bn_rows(p["b1"], p["g1"], p["be1"], p["m1"], p["v1"])
    band2 = conv_band(p["w2"])
    s2, t2 = bn_rows(p["b2"], p["g2"], p["be2"], p["m2"], p["v2"])

    return {k: jnp.asarray(v) for k, v in dict(
        wup=wup, bup=bup, band1=band1, s1=s1, t1=t1, band2=band2, s2=s2, t2=t2).items()}


# ----------------------------------------------------------------------------
# Wrapper
# ----------------------------------------------------------------------------
def _num_grid_groups(N):
    """One grid step per TensorCore: collapse the batch grid on single-TC chips (v5e/v6e);
    keep a 'parallel' per-image grid on multi-TC chips (v7x) so each core gets one image."""
    kind = ""
    try:
        kind = jax.devices()[0].device_kind.lower()
    except Exception:
        pass
    single_tc = any(s in kind for s in ("v5e", "v6e", "lite"))
    groups = 1 if single_tc else min(N, 2)
    if groups <= 0 or N % groups:
        groups = 1
    return groups


def up_forward(x_nchw, packed, n_groups=None):
    N, Cin, H, W = x_nchw.shape
    W2 = 2 * W
    u_cols = packed["wup"].shape[2]      # 2W*Cmid
    z_cols = packed["band1"].shape[2]    # 2W*C1
    o_cols = packed["band2"].shape[2]    # 2W*Cout
    Cout = o_cols // W2

    groups = _num_grid_groups(N) if n_groups is None else n_groups
    nb = N // groups                     # images per grid step

    # NCHW -> (N*H, W*Cin): tiny boundary transpose, lane-dense kernel input.
    xm = jnp.transpose(x_nchw, (0, 2, 3, 1)).reshape(N * H, W * Cin)

    out = pl.pallas_call(
        _fused_up_kernel,
        out_shape=jax.ShapeDtypeStruct((2, N * H, o_cols), jnp.float32),
        grid_spec=pltpu.PrefetchScalarGridSpec(
            num_scalar_prefetch=0,
            grid=(groups,),
            in_specs=[
                pl.BlockSpec((nb * H, W * Cin), lambda g: (g, 0)),
                # Constant-index weight/BN blocks (fetched once per core at this grid size).
                # TODO(synk): for repeated calls, keep these banded weights VMEM-resident across
                # pallas_calls (cross-call VMEM-ref + semaphore future) -- their ~1 MB HBM DMA is
                # the dominant cost of a single small-batch call.
                pl.BlockSpec(packed["wup"].shape, lambda g: (0, 0, 0)),
                pl.BlockSpec(packed["bup"].shape, lambda g: (0, 0)),
                pl.BlockSpec(packed["band1"].shape, lambda g: (0, 0, 0)),
                pl.BlockSpec(packed["s1"].shape, lambda g: (0, 0)),
                pl.BlockSpec(packed["t1"].shape, lambda g: (0, 0)),
                pl.BlockSpec(packed["band2"].shape, lambda g: (0, 0, 0)),
                pl.BlockSpec(packed["s2"].shape, lambda g: (0, 0)),
                pl.BlockSpec(packed["t2"].shape, lambda g: (0, 0)),
            ],
            out_specs=pl.BlockSpec((2, nb * H, o_cols), lambda g: (0, g, 0)),
            scratch_shapes=[
                pltpu.VMEM((2, nb, H + 1, u_cols), jnp.float32),  # parity-grouped upsampled image
                pltpu.VMEM((2, nb, H + 1, z_cols), jnp.float32),  # parity-grouped conv1 activation
            ],
        ),
        compiler_params=pltpu.CompilerParams(dimension_semantics=("parallel",)),
    )(xm, packed["wup"], packed["bup"], packed["band1"], packed["s1"], packed["t1"],
      packed["band2"], packed["s2"], packed["t2"])

    # (2, N*H, 2W*Cout) -> NCHW: free reshape + one small transpose on the final output.
    # (Kept per review: emitting NCHW in-kernel would force 32-lane masked stores.)
    out = out.reshape(2, N, H, W2, Cout).transpose(1, 4, 2, 0, 3)
    return out.reshape(N, Cout, 2 * H, W2)


# ----------------------------------------------------------------------------
# Pure-JAX reference (correctness check)
# ----------------------------------------------------------------------------
def ref_forward(x_nchw, p, eps=1e-5):
    x = jnp.transpose(x_nchw, (0, 2, 3, 1))
    N, H, W, _ = x.shape
    Cmid = p["w_up"].shape[1]
    t = jnp.einsum("nhwc,cdij->nhiwjd", x, p["w_up"])
    up = t.reshape(N, 2 * H, 2 * W, Cmid) + p["b_up"]

    def conv_bn_lrelu(z, w, b, g, be, m, v):
        wh = jnp.transpose(w, (2, 3, 1, 0))
        y = lax.conv_general_dilated(z, wh, (1, 1), "SAME",
                                     dimension_numbers=("NHWC", "HWIO", "NHWC")) + b
        y = g * (y - m) / jnp.sqrt(v + eps) + be
        return jnp.where(y > 0, y, 0.01 * y)

    y = conv_bn_lrelu(up, p["w1"], p["b1"], p["g1"], p["be1"], p["m1"], p["v1"])
    y = conv_bn_lrelu(y, p["w2"], p["b2"], p["g2"], p["be2"], p["m2"], p["v2"])
    return jnp.transpose(y, (0, 3, 1, 2))


# ----------------------------------------------------------------------------
# Main
# ----------------------------------------------------------------------------
if __name__ == "__main__":
    # Up_(in_channels=4, out_channels=8, bilinear=False):
    #   up   : ConvTranspose2d(4, 2, k=2, s=2)
    #   conv : Conv2d(2, 8, 3, pad=1) -> BN(8) -> LeakyReLU -> Conv2d(8, 8, 3, pad=1) -> BN(8) -> LeakyReLU
    Cin, Cout = 4, 8
    Cmid = Cin // 2
    N, H, W = 2, 16, 16

    key = jax.random.PRNGKey(0)
    ks = jax.random.split(key, 12)
    p = {
        "w_up": 0.1 * jax.random.normal(ks[0], (Cin, Cmid, 2, 2), jnp.float32),
        "b_up": 0.1 * jax.random.normal(ks[1], (Cmid,), jnp.float32),
        "w1": 0.1 * jax.random.normal(ks[2], (Cout, Cmid, 3, 3), jnp.float32),
        "b1": 0.1 * jax.random.normal(ks[3], (Cout,), jnp.float32),
        "g1": 1.0 + 0.1 * jax.random.normal(ks[4], (Cout,), jnp.float32),
        "be1": 0.1 * jax.random.normal(ks[5], (Cout,), jnp.float32),
        "m1": 0.05 * jax.random.normal(ks[6], (Cout,), jnp.float32),
        "v1": 1.0 + 0.1 * jax.random.uniform(ks[7], (Cout,), jnp.float32),
        "w2": 0.1 * jax.random.normal(ks[8], (Cout, Cout, 3, 3), jnp.float32),
        "b2": 0.1 * jax.random.normal(ks[9], (Cout,), jnp.float32),
        "g2": 1.0 + 0.1 * jax.random.normal(ks[10], (Cout,), jnp.float32),
        "be2": 0.1 * jax.random.normal(ks[11], (Cout,), jnp.float32),
        "m2": jnp.zeros((Cout,), jnp.float32),
        "v2": jnp.ones((Cout,), jnp.float32),
    }

    x = jax.random.normal(jax.random.PRNGKey(1), (N, Cin, H, W), jnp.float32)

    packed = _pack_params(p, H, W)
    out = jax.block_until_ready(up_forward(x, packed))
    ref = jax.block_until_ready(ref_forward(x, p))

    assert out.shape == (N, Cout, 2 * H, 2 * W), out.shape
    assert jnp.allclose(out, ref, atol=1e-4, rtol=1e-4), float(jnp.max(jnp.abs(out - ref)))
    print("KERNEL_OK")
</pallas_src>

<mosaic_0001>
module attributes {stable_mosaic.version = 11 : i64} {
  func.func @_fused_up_kernel(%arg0: i32, %arg1: memref<16x64xf32, #tpu.memory_space<vmem>>, %arg2: memref<2x64x64xf32, #tpu.memory_space<vmem>>, %arg3: memref<1x64xf32, #tpu.memory_space<vmem>>, %arg4: memref<3x64x256xf32, #tpu.memory_space<vmem>>, %arg5: memref<1x256xf32, #tpu.memory_space<vmem>>, %arg6: memref<1x256xf32, #tpu.memory_space<vmem>>, %arg7: memref<3x256x256xf32, #tpu.memory_space<vmem>>, %arg8: memref<1x256xf32, #tpu.memory_space<vmem>>, %arg9: memref<1x256xf32, #tpu.memory_space<vmem>>, %arg10: memref<2x16x256xf32, #tpu.memory_space<vmem>>, %arg11: memref<2x1x17x64xf32, #tpu.memory_space<vmem>>, %arg12: memref<2x1x17x256xf32, #tpu.memory_space<vmem>>) attributes {dimension_semantics = [#tpu.dimension_semantics<parallel>], iteration_bounds = array<i64: 2>, scalar_prefetch = 0 : i64, scratch_operands = 2 : i64, tpu.core_type = #tpu.core_type<tc>, window_params = [{transform_indices = @transform_0, window_bounds = array<i64: 16, 64>}, {pipeline_mode = #tpu.pipeline_mode<synchronous>, transform_indices = @transform_1, window_bounds = array<i64: 2, 64, 64>}, {pipeline_mode = #tpu.pipeline_mode<synchronous>, transform_indices = @transform_2, window_bounds = array<i64: 1, 64>}, {pipeline_mode = #tpu.pipeline_mode<synchronous>, transform_indices = @transform_3, window_bounds = array<i64: 3, 64, 256>}, {pipeline_mode = #tpu.pipeline_mode<synchronous>, transform_indices = @transform_4, window_bounds = array<i64: 1, 256>}, {pipeline_mode = #tpu.pipeline_mode<synchronous>, transform_indices = @transform_5, window_bounds = array<i64: 1, 256>}, {pipeline_mode = #tpu.pipeline_mode<synchronous>, transform_indices = @transform_6, window_bounds = array<i64: 3, 256, 256>}, {pipeline_mode = #tpu.pipeline_mode<synchronous>, transform_indices = @transform_7, window_bounds = array<i64: 1, 256>}, {pipeline_mode = #tpu.pipeline_mode<synchronous>, transform_indices = @transform_8, window_bounds = array<i64: 1, 256>}, {transform_indices = @transform_9, window_bounds = array<i64: 2, 16, 256>}]} {
    %cst = arith.constant 0.000000e+00 : f32
    %0 = vector.broadcast %cst : f32 to vector<1x64xf32>
    %cst_0 = arith.constant 0.000000e+00 : f32
    %1 = vector.broadcast %cst_0 : f32 to vector<1x256xf32>
    %c0 = arith.constant 0 : index
    %c0_1 = arith.constant 0 : index
    %c0_2 = arith.constant 0 : index
    %c0_3 = arith.constant 0 : index
    %2 = vector.load %arg11[%c0, %c0_1, %c0_2, %c0_3] : memref<2x1x17x64xf32, #tpu.memory_space<vmem>>, vector<1x1x1x64xf32>
    %3 = vector.shape_cast %2 : vector<1x1x1x64xf32> to vector<1x64xf32>
    %4 = vector.shape_cast %0 : vector<1x64xf32> to vector<1x1x1x64xf32>
    tpu.vector_store %arg11[%c0, %c0_1, %c0_2, %c0_3], %4 {strides = array<i32>} : memref<2x1x17x64xf32, #tpu.memory_space<vmem>>, vector<1x1x1x64xf32>,
    %c1 = arith.constant 1 : index
    %c0_4 = arith.constant 0 : index
    %c16 = arith.constant 16 : index
    %c0_5 = arith.constant 0 : index
    %5 = vector.load %arg11[%c1, %c0_4, %c16, %c0_5] : memref<2x1x17x64xf32, #tpu.memory_space<vmem>>, vector<1x1x1x64xf32>
    %6 = vector.shape_cast %5 : vector<1x1x1x64xf32> to vector<1x64xf32>
    %7 = vector.shape_cast %0 : vector<1x64xf32> to vector<1x1x1x64xf32>
    tpu.vector_store %arg11[%c1, %c0_4, %c16, %c0_5], %7 {strides = array<i32>} : memref<2x1x17x64xf32, #tpu.memory_space<vmem>>, vector<1x1x1x64xf32>,
    %c0_6 = arith.constant 0 : index
    %c0_7 = arith.constant 0 : index
    %c0_8 = arith.constant 0 : index
    %c0_9 = arith.constant 0 : index
    %8 = vector.load %arg12[%c0_6, %c0_7, %c0_8, %c0_9] : memref<2x1x17x256xf32, #tpu.memory_space<vmem>>, vector<1x1x1x256xf32>
    %9 = vector.shape_cast %8 : vector<1x1x1x256xf32> to vector<1x256xf32>
    %10 = vector.shape_cast %1 : vector<1x256xf32> to vector<1x1x1x256xf32>
    tpu.vector_store %arg12[%c0_6, %c0_7, %c0_8, %c0_9], %10 {strides = array<i32>} : memref<2x1x17x256xf32, #tpu.memory_space<vmem>>, vector<1x1x1x256xf32>,
    %c1_10 = arith.constant 1 : index
    %c0_11 = arith.constant 0 : index
    %c16_12 = arith.constant 16 : index
    %c0_13 = arith.constant 0 : index
    %11 = vector.load %arg12[%c1_10, %c0_11, %c16_12, %c0_13] : memref<2x1x17x256xf32, #tpu.memory_space<vmem>>, vector<1x1x1x256xf32>
    %12 = vector.shape_cast %11 : vector<1x1x1x256xf32> to vector<1x256xf32>
    %13 = vector.shape_cast %1 : vector<1x256xf32> to vector<1x1x1x256xf32>
    tpu.vector_store %arg12[%c1_10, %c0_11, %c16_12, %c0_13], %13 {strides = array<i32>} : memref<2x1x17x256xf32, #tpu.memory_space<vmem>>, vector<1x1x1x256xf32>,
    %c0_14 = arith.constant 0 : index
    %c0_15 = arith.constant 0 : index
    %14 = vector.load %arg1[%c0_14, %c0_15] : memref<16x64xf32, #tpu.memory_space<vmem>>, vector<16x64xf32>
    %c0_16 = arith.constant 0 : index
    %c0_17 = arith.constant 0 : index
    %c0_18 = arith.constant 0 : index
    %15 = vector.load %arg2[%c0_16, %c0_17, %c0_18] : memref<2x64x64xf32, #tpu.memory_space<vmem>>, vector<1x64x64xf32>
    %16 = vector.shape_cast %15 : vector<1x64x64xf32> to vector<64x64xf32>
    %cst_19 = arith.constant dense<0.000000e+00> : vector<16x64xf32>
    %17 = tpu.matmul %14, %16, %cst_19 {dimension_numbers = #tpu.dot_dimension_numbers<[1], [0], [0], [1], [0, 0, 1, 1], [], []>} : vector<16x64xf32>, vector<64x64xf32>, vector<16x64xf32> -> vector<16x64xf32>
    %c0_20 = arith.constant 0 : index
    %c0_21 = arith.constant 0 : index
    %18 = vector.load %arg3[%c0_20, %c0_21] : memref<1x64xf32, #tpu.memory_space<vmem>>, vector<1x64xf32>
    %19 = vector.broadcast %18 : vector<1x64xf32> to vector<16x64xf32>
    %20 = arith.addf %17, %19 : vector<16x64xf32>
    %c1_22 = arith.constant 1 : index
    %c0_23 = arith.constant 0 : index
    %c0_24 = arith.constant 0 : index
    %c0_25 = arith.constant 0 : index
    %21 = vector.load %arg11[%c1_22, %c0_23, %c0_24, %c0_25] : memref<2x1x17x64xf32, #tpu.memory_space<vmem>>, vector<1x1x16x64xf32>
    %22 = vector.shape_cast %21 : vector<1x1x16x64xf32> to vector<16x64xf32>
    %23 = vector.shape_cast %20 : vector<16x64xf32> to vector<1x1x16x64xf32>
    tpu.vector_store %arg11[%c1_22, %c0_23, %c0_24, %c0_25], %23 {strides = array<i32>} : memref<2x1x17x64xf32, #tpu.memory_space<vmem>>, vector<1x1x16x64xf32>,
    %c1_26 = arith.constant 1 : index
    %c0_27 = arith.constant 0 : index
    %c0_28 = arith.constant 0 : index
    %24 = vector.load %arg2[%c1_26, %c0_27, %c0_28] : memref<2x64x64xf32, #tpu.memory_space<vmem>>, vector<1x64x64xf32>
    %25 = vector.shape_cast %24 : vector<1x64x64xf32> to vector<64x64xf32>
    %cst_29 = arith.constant dense<0.000000e+00> : vector<16x64xf32>
    %26 = tpu.matmul %14, %25, %cst_29 {dimension_numbers = #tpu.dot_dimension_numbers<[1], [0], [0], [1], [0, 0, 1, 1], [], []>} : vector<16x64xf32>, vector<64x64xf32>, vector<16x64xf32> -> vector<16x64xf32>
    %c0_30 = arith.constant 0 : index
    %c0_31 = arith.constant 0 : index
    %27 = vector.load %arg3[%c0_30, %c0_31] : memref<1x64xf32, #tpu.memory_space<vmem>>, vector<1x64xf32>
    %28 = vector.broadcast %27 : vector<1x64xf32> to vector<16x64xf32>
    %29 = arith.addf %26, %28 : vector<16x64xf32>
    %c0_32 = arith.constant 0 : index
    %c0_33 = arith.constant 0 : index
    %c1_34 = arith.constant 1 : index
    %c0_35 = arith.constant 0 : index
    %30 = vector.load %arg11[%c0_32, %c0_33, %c1_34, %c0_35] : memref<2x1x17x64xf32, #tpu.memory_space<vmem>>, vector<1x1x16x64xf32>
    %31 = vector.shape_cast %30 : vector<1x1x16x64xf32> to vector<16x64xf32>
    %32 = vector.shape_cast %29 : vector<16x64xf32> to vector<1x1x16x64xf32>
    tpu.vector_store %arg11[%c0_32, %c0_33, %c1_34, %c0_35], %32 {strides = array<i32>} : memref<2x1x17x64xf32, #tpu.memory_space<vmem>>, vector<1x1x16x64xf32>,
    %c0_36 = arith.constant 0 : index
    %c0_37 = arith.constant 0 : index
    %c0_38 = arith.constant 0 : index
    %c0_39 = arith.constant 0 : index
    %33 = vector.load %arg11[%c0_36, %c0_37, %c0_38, %c0_39] : memref<2x1x17x64xf32, #tpu.memory_space<vmem>>, vector<1x1x16x64xf32>
    %34 = vector.shape_cast %33 : vector<1x1x16x64xf32> to vector<16x64xf32>
    %c0_40 = arith.constant 0 : index
    %c0_41 = arith.constant 0 : index
    %c0_42 = arith.constant 0 : index
    %35 = vector.load %arg4[%c0_40, %c0_41, %c0_42] : memref<3x64x256xf32, #tpu.memory_space<vmem>>, vector<1x64x256xf32>
    %36 = vector.shape_cast %35 : vector<1x64x256xf32> to vector<64x256xf32>
    %cst_43 = arith.constant dense<0.000000e+00> : vector<16x256xf32>
    %37 = tpu.matmul %34, %36, %cst_43 {dimension_numbers = #tpu.dot_dimension_numbers<[1], [0], [0], [1], [0, 0, 1, 1], [], []>} : vector<16x64xf32>, vector<64x256xf32>, vector<16x256xf32> -> vector<16x256xf32>
    %c1_44 = arith.constant 1 : index
    %c0_45 = arith.constant 0 : index
    %c0_46 = arith.constant 0 : index
    %c0_47 = arith.constant 0 : index
    %38 = vector.load %arg11[%c1_44, %c0_45, %c0_46, %c0_47] : memref<2x1x17x64xf32, #tpu.memory_space<vmem>>, vector<1x1x16x64xf32>
    %39 = vector.shape_cast %38 : vector<1x1x16x64xf32> to vector<16x64xf32>
    %c1_48 = arith.constant 1 : index
    %c0_49 = arith.constant 0 : index
    %c0_50 = arith.constant 0 : index
    %40 = vector.load %arg4[%c1_48, %c0_49, %c0_50] : memref<3x64x256xf32, #tpu.memory_space<vmem>>, vector<1x64x256xf32>
    %41 = vector.shape_cast %40 : vector<1x64x256xf32> to vector<64x256xf32>
    %cst_51 = arith.constant dense<0.000000e+00> : vector<16x256xf32>
    %42 = tpu.matmul %39, %41, %cst_51 {dimension_numbers = #tpu.dot_dimension_numbers<[1], [0], [0], [1], [0, 0, 1, 1], [], []>} : vector<16x64xf32>, vector<64x256xf32>, vector<16x256xf32> -> vector<16x256xf32>
    %43 = arith.addf %37, %42 : vector<16x256xf32>
    %c0_52 = arith.constant 0 : index
    %c0_53 = arith.constant 0 : index
    %c1_54 = arith.constant 1 : index
    %c0_55 = arith.constant 0 : index
    %44 = vector.load %arg11[%c0_52, %c0_53, %c1_54, %c0_55] : memref<2x1x17x64xf32, #tpu.memory_space<vmem>>, vector<1x1x16x64xf32>
    %45 = vector.shape_cast %44 : vector<1x1x16x64xf32> to vector<16x64xf32>
    %c2 = arith.constant 2 : index
    %c0_56 = arith.constant 0 : index
    %c0_57 = arith.constant 0 : index
    %46 = vector.load %arg4[%c2, %c0_56, %c0_57] : memref<3x64x256xf32, #tpu.memory_space<vmem>>, vector<1x64x256xf32>
    %47 = vector.shape_cast %46 : vector<1x64x256xf32> to vector<64x256xf32>
    %cst_58 = arith.constant dense<0.000000e+00> : vector<16x256xf32>
    %48 = tpu.matmul %45, %47, %cst_58 {dimension_numbers = #tpu.dot_dimension_numbers<[1], [0], [0], [1], [0, 0, 1, 1], [], []>} : vector<16x64xf32>, vector<64x256xf32>, vector<16x256xf32> -> vector<16x256xf32>
    %49 = arith.addf %43, %48 : vector<16x256xf32>
    %c0_59 = arith.constant 0 : index
    %c0_60 = arith.constant 0 : index
    %50 = vector.load %arg5[%c0_59, %c0_60] : memref<1x256xf32, #tpu.memory_space<vmem>>, vector<1x256xf32>
    %51 = vector.broadcast %50 : vector<1x256xf32> to vector<16x256xf32>
    %52 = arith.mulf %49, %51 : vector<16x256xf32>
    %c0_61 = arith.constant 0 : index
    %c0_62 = arith.constant 0 : index
    %53 = vector.load %arg6[%c0_61, %c0_62] : memref<1x256xf32, #tpu.memory_space<vmem>>, vector<1x256xf32>
    %54 = vector.broadcast %53 : vector<1x256xf32> to vector<16x256xf32>
    %55 = arith.addf %52, %54 : vector<16x256xf32>
    %cst_63 = arith.constant 0.000000e+00 : f32
    %56 = vector.broadcast %cst_63 : f32 to vector<16x256xf32>
    %57 = arith.cmpf ogt, %55, %56 : vector<16x256xf32>
    %cst_64 = arith.constant 0.00999999977 : f32
    %58 = vector.broadcast %cst_64 : f32 to vector<16x256xf32>
    %59 = arith.mulf %58, %55 : vector<16x256xf32>
    %60 = arith.select %57, %55, %59 : vector<16x256xi1>, vector<16x256xf32>
    %c1_65 = arith.constant 1 : index
    %c0_66 = arith.constant 0 : index
    %c0_67 = arith.constant 0 : index
    %c0_68 = arith.constant 0 : index
    %61 = vector.load %arg12[%c1_65, %c0_66, %c0_67, %c0_68] : memref<2x1x17x256xf32, #tpu.memory_space<vmem>>, vector<1x1x16x256xf32>
    %62 = vector.shape_cast %61 : vector<1x1x16x256xf32> to vector<16x256xf32>
    %63 = vector.shape_cast %60 : vector<16x256xf32> to vector<1x1x16x256xf32>
    tpu.vector_store %arg12[%c1_65, %c0_66, %c0_67, %c0_68], %63 {strides = array<i32>} : memref<2x1x17x256xf32, #tpu.memory_space<vmem>>, vector<1x1x16x256xf32>,
    %c1_69 = arith.constant 1 : index
    %c0_70 = arith.constant 0 : index
    %c0_71 = arith.constant 0 : index
    %c0_72 = arith.constant 0 : index
    %64 = vector.load %arg11[%c1_69, %c0_70, %c0_71, %c0_72] : memref<2x1x17x64xf32, #tpu.memory_space<vmem>>, vector<1x1x16x64xf32>
    %65 = vector.shape_cast %64 : vector<1x1x16x64xf32> to vector<16x64xf32>
    %c0_73 = arith.constant 0 : index
    %c0_74 = arith.constant 0 : index
    %c0_75 = arith.constant 0 : index
    %66 = vector.load %arg4[%c0_73, %c0_74, %c0_75] : memref<3x64x256xf32, #tpu.memory_space<vmem>>, vector<1x64x256xf32>
    %67 = vector.shape_cast %66 : vector<1x64x256xf32> to vector<64x256xf32>
    %cst_76 = arith.constant dense<0.000000e+00> : vector<16x256xf32>
    %68 = tpu.matmul %65, %67, %cst_76 {dimension_numbers = #tpu.dot_dimension_numbers<[1], [0], [0], [1], [0, 0, 1, 1], [], []>} : vector<16x64xf32>, vector<64x256xf32>, vector<16x256xf32> -> vector<16x256xf32>
    %c0_77 = arith.constant 0 : index
    %c0_78 = arith.constant 0 : index
    %c1_79 = arith.constant 1 : index
    %c0_80 = arith.constant 0 : index
    %69 = vector.load %arg11[%c0_77, %c0_78, %c1_79, %c0_80] : memref<2x1x17x64xf32, #tpu.memory_space<vmem>>, vector<1x1x16x64xf32>
    %70 = vector.shape_cast %69 : vector<1x1x16x64xf32> to vector<16x64xf32>
    %c1_81 = arith.constant 1 : index
    %c0_82 = arith.constant 0 : index
    %c0_83 = arith.constant 0 : index
    %71 = vector.load %arg4[%c1_81, %c0_82, %c0_83] : memref<3x64x256xf32, #tpu.memory_space<vmem>>, vector<1x64x256xf32>
    %72 = vector.shape_cast %71 : vector<1x64x256xf32> to vector<64x256xf32>
    %cst_84 = arith.constant dense<0.000000e+00> : vector<16x256xf32>
    %73 = tpu.matmul %70, %72, %cst_84 {dimension_numbers = #tpu.dot_dimension_numbers<[1], [0], [0], [1], [0, 0, 1, 1], [], []>} : vector<16x64xf32>, vector<64x256xf32>, vector<16x256xf32> -> vector<16x256xf32>
    %74 = arith.addf %68, %73 : vector<16x256xf32>
    %c1_85 = arith.constant 1 : index
    %c0_86 = arith.constant 0 : index
    %c1_87 = arith.constant 1 : index
    %c0_88 = arith.constant 0 : index
    %75 = vector.load %arg11[%c1_85, %c0_86, %c1_87, %c0_88] : memref<2x1x17x64xf32, #tpu.memory_space<vmem>>, vector<1x1x16x64xf32>
    %76 = vector.shape_cast %75 : vector<1x1x16x64xf32> to vector<16x64xf32>
    %c2_89 = arith.constant 2 : index
    %c0_90 = arith.constant 0 : index
    %c0_91 = arith.constant 0 : index
    %77 = vector.load %arg4[%c2_89, %c0_90, %c0_91] : memref<3x64x256xf32, #tpu.memory_space<vmem>>, vector<1x64x256xf32>
    %78 = vector.shape_cast %77 : vector<1x64x256xf32> to vector<64x256xf32>
    %cst_92 = arith.constant dense<0.000000e+00> : vector<16x256xf32>
    %79 = tpu.matmul %76, %78, %cst_92 {dimension_numbers = #tpu.dot_dimension_numbers<[1], [0], [0], [1], [0, 0, 1, 1], [], []>} : vector<16x64xf32>, vector<64x256xf32>, vector<16x256xf32> -> vector<16x256xf32>
    %80 = arith.addf %74, %79 : vector<16x256xf32>
    %c0_93 = arith.constant 0 : index
    %c0_94 = arith.constant 0 : index
    %81 = vector.load %arg5[%c0_93, %c0_94] : memref<1x256xf32, #tpu.memory_space<vmem>>, vector<1x256xf32>
    %82 = vector.broadcast %81 : vector<1x256xf32> to vector<16x256xf32>
    %83 = arith.mulf %80, %82 : vector<16x256xf32>
    %c0_95 = arith.constant 0 : index
    %c0_96 = arith.constant 0 : index
    %84 = vector.load %arg6[%c0_95, %c0_96] : memref<1x256xf32, #tpu.memory_space<vmem>>, vector<1x256xf32>
    %85 = vector.broadcast %84 : vector<1x256xf32> to vector<16x256xf32>
    %86 = arith.addf %83, %85 : vector<16x256xf32>
    %cst_97 = arith.constant 0.000000e+00 : f32
    %87 = vector.broadcast %cst_97 : f32 to vector<16x256xf32>
    %88 = arith.cmpf ogt, %86, %87 : vector<16x256xf32>
    %cst_98 = arith.constant 0.00999999977 : f32
    %89 = vector.broadcast %cst_98 : f32 to vector<16x256xf32>
    %90 = arith.mulf %89, %86 : vector<16x256xf32>
    %91 = arith.select %88, %86, %90 : vector<16x256xi1>, vector<16x256xf32>
    %c0_99 = arith.constant 0 : index
    %c0_100 = arith.constant 0 : index
    %c1_101 = arith.constant 1 : index
    %c0_102 = arith.constant 0 : index
    %92 = vector.load %arg12[%c0_99, %c0_100, %c1_101, %c0_102] : memref<2x1x17x256xf32, #tpu.memory_space<vmem>>, vector<1x1x16x256xf32>
    %93 = vector.shape_cast %92 : vector<1x1x16x256xf32> to vector<16x256xf32>
    %94 = vector.shape_cast %91 : vector<16x256xf32> to vector<1x1x16x256xf32>
    tpu.vector_store %arg12[%c0_99, %c0_100, %c1_101, %c0_102], %94 {strides = array<i32>} : memref<2x1x17x256xf32, #tpu.memory_space<vmem>>, vector<1x1x16x256xf32>,
    %c0_103 = arith.constant 0 : index
    %c0_104 = arith.constant 0 : index
    %c0_105 = arith.constant 0 : index
    %c0_106 = arith.constant 0 : index
    %95 = vector.load %arg12[%c0_103, %c0_104, %c0_105, %c0_106] : memref<2x1x17x256xf32, #tpu.memory_space<vmem>>, vector<1x1x16x256xf32>
    %96 = vector.shape_cast %95 : vector<1x1x16x256xf32> to vector<16x256xf32>
    %c0_107 = arith.constant 0 : index
    %c0_108 = arith.constant 0 : index
    %c0_109 = arith.constant 0 : index
    %97 = vector.load %arg7[%c0_107, %c0_108, %c0_109] : memref<3x256x256xf32, #tpu.memory_space<vmem>>, vector<1x256x256xf32>
    %98 = vector.shape_cast %97 : vector<1x256x256xf32> to vector<256x256xf32>
    %cst_110 = arith.constant dense<0.000000e+00> : vector<16x256xf32>
    %99 = tpu.matmul %96, %98, %cst_110 {dimension_numbers = #tpu.dot_dimension_numbers<[1], [0], [0], [1], [0, 0, 1, 1], [], []>} : vector<16x256xf32>, vector<256x256xf32>, vector<16x256xf32> -> vector<16x256xf32>
    %c1_111 = arith.constant 1 : index
    %c0_112 = arith.constant 0 : index
    %c0_113 = arith.constant 0 : index
    %c0_114 = arith.constant 0 : index
    %100 = vector.load %arg12[%c1_111, %c0_112, %c0_113, %c0_114] : memref<2x1x17x256xf32, #tpu.memory_space<vmem>>, vector<1x1x16x256xf32>
    %101 = vector.shape_cast %100 : vector<1x1x16x256xf32> to vector<16x256xf32>
    %c1_115 = arith.constant 1 : index
    %c0_116 = arith.constant 0 : index
    %c0_117 = arith.constant 0 : index
    %102 = vector.load %arg7[%c1_115, %c0_116, %c0_117] : memref<3x256x256xf32, #tpu.memory_space<vmem>>, vector<1x256x256xf32>
    %103 = vector.shape_cast %102 : vector<1x256x256xf32> to vector<256x256xf32>
    %cst_118 = arith.constant dense<0.000000e+00> : vector<16x256xf32>
    %104 = tpu.matmul %101, %103, %cst_118 {dimension_numbers = #tpu.dot_dimension_numbers<[1], [0], [0], [1], [0, 0, 1, 1], [], []>} : vector<16x256xf32>, vector<256x256xf32>, vector<16x256xf32> -> vector<16x256xf32>
    %105 = arith.addf %99, %104 : vector<16x256xf32>
    %c0_119 = arith.constant 0 : index
    %c0_120 = arith.constant 0 : index
    %c1_121 = arith.constant 1 : index
    %c0_122 = arith.constant 0 : index
    %106 = vector.load %arg12[%c0_119, %c0_120, %c1_121, %c0_122] : memref<2x1x17x256xf32, #tpu.memory_space<vmem>>, vector<1x1x16x256xf32>
    %107 = vector.shape_cast %106 : vector<1x1x16x256xf32> to vector<16x256xf32>
    %c2_123 = arith.constant 2 : index
    %c0_124 = arith.constant 0 : index
    %c0_125 = arith.constant 0 : index
    %108 = vector.load %arg7[%c2_123, %c0_124, %c0_125] : memref<3x256x256xf32, #tpu.memory_space<vmem>>, vector<1x256x256xf32>
    %109 = vector.shape_cast %108 : vector<1x256x256xf32> to vector<256x256xf32>
    %cst_126 = arith.constant dense<0.000000e+00> : vector<16x256xf32>
    %110 = tpu.matmul %107, %109, %cst_126 {dimension_numbers = #tpu.dot_dimension_numbers<[1], [0], [0], [1], [0, 0, 1, 1], [], []>} : vector<16x256xf32>, vector<256x256xf32>, vector<16x256xf32> -> vector<16x256xf32>
    %111 = arith.addf %105, %110 : vector<16x256xf32>
    %c0_127 = arith.constant 0 : index
    %c0_128 = arith.constant 0 : index
    %112 = vector.load %arg8[%c0_127, %c0_128] : memref<1x256xf32, #tpu.memory_space<vmem>>, vector<1x256xf32>
    %113 = vector.broadcast %112 : vector<1x256xf32> to vector<16x256xf32>
    %114 = arith.mulf %111, %113 : vector<16x256xf32>
    %c0_129 = arith.constant 0 : index
    %c0_130 = arith.constant 0 : index
    %115 = vector.load %arg9[%c0_129, %c0_130] : memref<1x256xf32, #tpu.memory_space<vmem>>, vector<1x256xf32>
    %116 = vector.broadcast %115 : vector<1x256xf32> to vector<16x256xf32>
    %117 = arith.addf %114, %116 : vector<16x256xf32>
    %cst_131 = arith.constant 0.000000e+00 : f32
    %118 = vector.broadcast %cst_131 : f32 to vector<16x256xf32>
    %119 = arith.cmpf ogt, %117, %118 : vector<16x256xf32>
    %cst_132 = arith.constant 0.00999999977 : f32
    %120 = vector.broadcast %cst_132 : f32 to vector<16x256xf32>
    %121 = arith.mulf %120, %117 : vector<16x256xf32>
    %122 = arith.select %119, %117, %121 : vector<16x256xi1>, vector<16x256xf32>
    %c0_133 = arith.constant 0 : index
    %c0_134 = arith.constant 0 : index
    %c0_135 = arith.constant 0 : index
    %123 = vector.load %arg10[%c0_133, %c0_134, %c0_135] : memref<2x16x256xf32, #tpu.memory_space<vmem>>, vector<1x16x256xf32>
    %124 = vector.shape_cast %123 : vector<1x16x256xf32> to vector<16x256xf32>
    %125 = vector.shape_cast %122 : vector<16x256xf32> to vector<1x16x256xf32>
    tpu.vector_store %arg10[%c0_133, %c0_134, %c0_135], %125 {strides = array<i32>} : memref<2x16x256xf32, #tpu.memory_space<vmem>>, vector<1x16x256xf32>,
    %c1_136 = arith.constant 1 : index
    %c0_137 = arith.constant 0 : index
    %c0_138 = arith.constant 0 : index
    %c0_139 = arith.constant 0 : index
    %126 = vector.load %arg12[%c1_136, %c0_137, %c0_138, %c0_139] : memref<2x1x17x256xf32, #tpu.memory_space<vmem>>, vector<1x1x16x256xf32>
    %127 = vector.shape_cast %126 : vector<1x1x16x256xf32> to vector<16x256xf32>
    %c0_140 = arith.constant 0 : index
    %c0_141 = arith.constant 0 : index
    %c0_142 = arith.constant 0 : index
    %128 = vector.load %arg7[%c0_140, %c0_141, %c0_142] : memref<3x256x256xf32, #tpu.memory_space<vmem>>, vector<1x256x256xf32>
    %129 = vector.shape_cast %128 : vector<1x256x256xf32> to vector<256x256xf32>
    %cst_143 = arith.constant dense<0.000000e+00> : vector<16x256xf32>
    %130 = tpu.matmul %127, %129, %cst_143 {dimension_numbers = #tpu.dot_dimension_numbers<[1], [0], [0], [1], [0, 0, 1, 1], [], []>} : vector<16x256xf32>, vector<256x256xf32>, vector<16x256xf32> -> vector<16x256xf32>
    %c0_144 = arith.constant 0 : index
    %c0_145 = arith.constant 0 : index
    %c1_146 = arith.constant 1 : index
    %c0_147 = arith.constant 0 : index
    %131 = vector.load %arg12[%c0_144, %c0_145, %c1_146, %c0_147] : memref<2x1x17x256xf32, #tpu.memory_space<vmem>>, vector<1x1x16x256xf32>
    %132 = vector.shape_cast %131 : vector<1x1x16x256xf32> to vector<16x256xf32>
    %c1_148 = arith.constant 1 : index
    %c0_149 = arith.constant 0 : index
    %c0_150 = arith.constant 0 : index
    %133 = vector.load %arg7[%c1_148, %c0_149, %c0_150] : memref<3x256x256xf32, #tpu.memory_space<vmem>>, vector<1x256x256xf32>
    %134 = vector.shape_cast %133 : vector<1x256x256xf32> to vector<256x256xf32>
    %cst_151 = arith.constant dense<0.000000e+00> : vector<16x256xf32>
    %135 = tpu.matmul %132, %134, %cst_151 {dimension_numbers = #tpu.dot_dimension_numbers<[1], [0], [0], [1], [0, 0, 1, 1], [], []>} : vector<16x256xf32>, vector<256x256xf32>, vector<16x256xf32> -> vector<16x256xf32>
    %136 = arith.addf %130, %135 : vector<16x256xf32>
    %c1_152 = arith.constant 1 : index
    %c0_153 = arith.constant 0 : index
    %c1_154 = arith.constant 1 : index
    %c0_155 = arith.constant 0 : index
    %137 = vector.load %arg12[%c1_152, %c0_153, %c1_154, %c0_155] : memref<2x1x17x256xf32, #tpu.memory_space<vmem>>, vector<1x1x16x256xf32>
    %138 = vector.shape_cast %137 : vector<1x1x16x256xf32> to vector<16x256xf32>
    %c2_156 = arith.constant 2 : index
    %c0_157 = arith.constant 0 : index
    %c0_158 = arith.constant 0 : index
    %139 = vector.load %arg7[%c2_156, %c0_157, %c0_158] : memref<3x256x256xf32, #tpu.memory_space<vmem>>, vector<1x256x256xf32>
    %140 = vector.shape_cast %139 : vector<1x256x256xf32> to vector<256x256xf32>
    %cst_159 = arith.constant dense<0.000000e+00> : vector<16x256xf32>
    %141 = tpu.matmul %138, %140, %cst_159 {dimension_numbers = #tpu.dot_dimension_numbers<[1], [0], [0], [1], [0, 0, 1, 1], [], []>} : vector<16x256xf32>, vector<256x256xf32>, vector<16x256xf32> -> vector<16x256xf32>
    %142 = arith.addf %136, %141 : vector<16x256xf32>
    %c0_160 = arith.constant 0 : index
    %c0_161 = arith.constant 0 : index
    %143 = vector.load %arg8[%c0_160, %c0_161] : memref<1x256xf32, #tpu.memory_space<vmem>>, vector<1x256xf32>
    %144 = vector.broadcast %143 : vector<1x256xf32> to vector<16x256xf32>
    %145 = arith.mulf %142, %144 : vector<16x256xf32>
    %c0_162 = arith.constant 0 : index
    %c0_163 = arith.constant 0 : index
    %146 = vector.load %arg9[%c0_162, %c0_163] : memref<1x256xf32, #tpu.memory_space<vmem>>, vector<1x256xf32>
    %147 = vector.broadcast %146 : vector<1x256xf32> to vector<16x256xf32>
    %148 = arith.addf %145, %147 : vector<16x256xf32>
    %cst_164 = arith.constant 0.000000e+00 : f32
    %149 = vector.broadcast %cst_164 : f32 to vector<16x256xf32>
    %150 = arith.cmpf ogt, %148, %149 : vector<16x256xf32>
    %cst_165 = arith.constant 0.00999999977 : f32
    %151 = vector.broadcast %cst_165 : f32 to vector<16x256xf32>
    %152 = arith.mulf %151, %148 : vector<16x256xf32>
    %153 = arith.select %150, %148, %152 : vector<16x256xi1>, vector<16x256xf32>
    %c1_166 = arith.constant 1 : index
    %c0_167 = arith.constant 0 : index
    %c0_168 = arith.constant 0 : index
    %154 = vector.load %arg10[%c1_166, %c0_167, %c0_168] : memref<2x16x256xf32, #tpu.memory_space<vmem>>, vector<1x16x256xf32>
    %155 = vector.shape_cast %154 : vector<1x16x256xf32> to vector<16x256xf32>
    %156 = vector.shape_cast %153 : vector<16x256xf32> to vector<1x16x256xf32>
    tpu.vector_store %arg10[%c1_166, %c0_167, %c0_168], %156 {strides = array<i32>} : memref<2x16x256xf32, #tpu.memory_space<vmem>>, vector<1x16x256xf32>,
    return
  }
  func.func @transform_0(%arg0: i32) -> (i32, i32) {
    %c0_i32 = arith.constant 0 : i32
    %c0_i32_0 = arith.constant 0 : i32
    return %arg0, %c0_i32 : i32, i32
  }
  func.func @transform_1(%arg0: i32) -> (i32, i32, i32) {
    %c0_i32 = arith.constant 0 : i32
    %c0_i32_0 = arith.constant 0 : i32
    %c0_i32_1 = arith.constant 0 : i32
    %c0_i32_2 = arith.constant 0 : i32
    return %c0_i32, %c0_i32_0, %c0_i32_1 : i32, i32, i32
  }
  func.func @transform_2(%arg0: i32) -> (i32, i32) {
    %c0_i32 = arith.constant 0 : i32
    %c0_i32_0 = arith.constant 0 : i32
    %c0_i32_1 = arith.constant 0 : i32
    return %c0_i32, %c0_i32_0 : i32, i32
  }
  func.func @transform_3(%arg0: i32) -> (i32, i32, i32) {
    %c0_i32 = arith.constant 0 : i32
    %c0_i32_0 = arith.constant 0 : i32
    %c0_i32_1 = arith.constant 0 : i32
    %c0_i32_2 = arith.constant 0 : i32
    return %c0_i32, %c0_i32_0, %c0_i32_1 : i32, i32, i32
  }
  func.func @transform_4(%arg0: i32) -> (i32, i32) {
    %c0_i32 = arith.constant 0 : i32
    %c0_i32_0 = arith.constant 0 : i32
    %c0_i32_1 = arith.constant 0 : i32
    return %c0_i32, %c0_i32_0 : i32, i32
  }
  func.func @transform_5(%arg0: i32) -> (i32, i32) {
    %c0_i32 = arith.constant 0 : i32
    %c0_i32_0 = arith.constant 0 : i32
    %c0_i32_1 = arith.constant 0 : i32
    return %c0_i32, %c0_i32_0 : i32, i32
  }
  func.func @transform_6(%arg0: i32) -> (i32, i32, i32) {
    %c0_i32 = arith.constant 0 : i32
    %c0_i32_0 = arith.constant 0 : i32
    %c0_i32_1 = arith.constant 0 : i32
    %c0_i32_2 = arith.constant 0 : i32
    return %c0_i32, %c0_i32_0, %c0_i32_1 : i32, i32, i32
  }
  func.func @transform_7(%arg0: i32) -> (i32, i32) {
    %c0_i32 = arith.constant 0 : i32
    %c0_i32_0 = arith.constant 0 : i32
    %c0_i32_1 = arith.constant 0 : i32
    return %c0_i32, %c0_i32_0 : i32, i32
  }
  func.func @transform_8(%arg0: i32) -> (i32, i32) {
    %c0_i32 = arith.constant 0 : i32
    %c0_i32_0 = arith.constant 0 : i32
    %c0_i32_1 = arith.constant 0 : i32
    return %c0_i32, %c0_i32_0 : i32, i32
  }
  func.func @transform_9(%arg0: i32) -> (i32, i32, i32) {
    %c0_i32 = arith.constant 0 : i32
    %c0_i32_0 = arith.constant 0 : i32
    %c0_i32_1 = arith.constant 0 : i32
    return %c0_i32, %arg0, %c0_i32_0 : i32, i32, i32
  }
}

</mosaic_0001>

<llo_original>
// kernel: tpu_custom_call.1
$region0: #{tpu_custom_call.1}
  #allocation0 [shape = 'u32[]', space=smem, size = 0x4, offset = 0x4, fixed_abs, tag = 'smem constant byte address 0x4 - core index']
  #allocation1 [shape = 'u32[72,128]{1,0:T(1,128)}', space=vmem, size = 0x9000, scoped, tag = 'internal scratch']
  #allocation2 [shape = 'f32[2,1,17,64]{3,2,1,0:T(8,128)}', space=vmem, size = 0x6000, scoped, tag = 'scratch operand']
  #allocation3 [shape = 'f32[2,1,17,256]{3,2,1,0:T(8,128)}', space=vmem, size = 0xc000, scoped, tag = 'scratch operand']
  #allocation16 [shape = 's32[]', space=sflag, size = 0x4, offset = 0, fixed_abs, tag = 'sflag constant byte address 0x0 - dummy sync flag']
  %s0 = inlined_call_operand.hbm [shape: f32[32,64], index: 0, kind: input, shape index: {}]
  %s1 = inlined_call_operand.hbm [shape: f32[2,64,64], index: 1, kind: input, shape index: {}]
  %s2 = inlined_call_operand.hbm [shape: f32[1,64], index: 2, kind: input, shape index: {}]
  %s3 = inlined_call_operand.hbm [shape: f32[3,64,256], index: 3, kind: input, shape index: {}]
  %s4 = inlined_call_operand.vmem [shape: f32[1,256], index: 4, kind: input, shape index: {}]
  %s5 = inlined_call_operand.vmem [shape: f32[1,256], index: 5, kind: input, shape index: {}]
  %s6 = inlined_call_operand.hbm [shape: f32[3,256,256], index: 6, kind: input, shape index: {}]
  %s7 = inlined_call_operand.vmem [shape: f32[1,256], index: 7, kind: input, shape index: {}]
  %s8 = inlined_call_operand.hbm [shape: f32[1,256], index: 8, kind: input, shape index: {}]
  %s9 = inlined_call_operand.hbm [shape: f32[2,32,256], index: 9, kind: output, shape index: {}]
  %s10 = sld [smem:[#allocation0]]
  $region93: #{tpu_custom_call.1} parent=0
    _
  %s12 = ssub.s32 1, %s10
  %s13 = scalar_select 0, %s12, %s10
  $region1: #{tpu_custom_call.1} parent=0
    #allocation4 [shape = 'u8[16384]{0}', space=vmem, size = 0x4000, scoped, tag = 'input window, operand 0']
    #allocation5 [shape = 's32[2]{0}', space=sflag, size = 0x8, scoped, tag = 'scoped memory for tpu_custom_call.1']
    #allocation6 [shape = 's32[2]{0}', space=sflag, size = 0x8, scoped, tag = 'scoped memory for tpu_custom_call.1']
    #allocation7 [shape = 'u8[65536]{0}', space=vmem, size = 0x10000, scoped, tag = 'input window, operand 1, single buffered']
    #allocation8 [shape = 's32[1]{0}', space=sflag, size = 0x4, scoped, tag = 'scoped memory for tpu_custom_call.1']
    #allocation9 [shape = 'u8[512]{0}', space=vmem, size = 0x400, scoped, tag = 'input window, operand 2, single buffered']
    #allocation10 [shape = 'u8[196608]{0}', space=vmem, size = 0x30000, scoped, tag = 'input window, operand 3, single buffered']
    #allocation11 [shape = 's32[1]{0}', space=sflag, size = 0x4, scoped, tag = 'scoped memory for tpu_custom_call.1']
    #allocation12 [shape = 'u8[786432]{0}', space=vmem, size = 0xc0000, scoped, tag = 'input window, operand 6, single buffered']
    #allocation13 [shape = 'u8[1024]{0}', space=vmem, size = 0x400, scoped, tag = 'input window, operand 8, single buffered']
    #allocation14 [shape = 's32[1]{0}', space=sflag, size = 0x4, scoped, tag = 'scoped memory for tpu_custom_call.1']
    #allocation15 [shape = 'u8[65536]{0}', space=vmem, size = 0x10000, scoped, tag = 'output window, operand 0']
    %14 = vsyncpa [#allocation5], 0
    %s15 = scalar_lea.sflag [#allocation5], 1
    %16 = vsyncpa %s15, 0
    %17 = vsyncpa [#allocation8], 0
    %18 = vsyncpa [#allocation11], 0
    %19 = vsyncpa [#allocation14], 0
    %20 = vsyncpa [#allocation6], 0
    %s21 = scalar_lea.sflag [#allocation6], 1
    %22 = vsyncpa %s21, 0
    loop: start=0, step=1, limit=4
    $region2: #{tpu_custom_call.1} parent=1 // loop_pre_header
      _
    $region3: #{tpu_custom_call.1} parent=1 // loop_header
      %s24 = sphi 0, %s28
      %p25 = scmp.ge.s32.totalorder %s24, 4
      %s34 = sphi 0, %s36
      %s37 = sphi 0, %s34
      %s38 = sphi 0, %s37
      %s54 = sphi 0, %s38
      %s58 = sphi 0, %s58
      %s60 = sphi 0, %s58
      %s61 = sphi 0, %s60
      %s75 = sphi 0, %s61
      %s79 = sphi 0, %s79
      %s81 = sphi 0, %s79
      %s82 = sphi 0, %s81
      %s96 = sphi 0, %s82
      %s100 = sphi 0, %s100
      %s102 = sphi 0, %s100
      %s103 = sphi 0, %s102
      %s117 = sphi 0, %s103
      %s121 = sphi 0, %s121
      %s123 = sphi 0, %s121
      %s124 = sphi 0, %s123
      %s138 = sphi 0, %s124
      %s142 = sphi 0, %s142
      %s144 = sphi 0, %s142
      %s145 = sphi 0, %s144
      %s159 = sphi 0, %s145
      %s163 = sphi 0, %s163
      %s165 = sphi 0, %s163
      %s166 = sphi 0, %s165
      %s180 = sphi 0, %s166
      %s184 = sphi 0, %s184
      %s186 = sphi 0, %s184
      %s187 = sphi 0, %s186
      %s201 = sphi 0, %s187
      %s205 = sphi 0, %s205
      %s207 = sphi 0, %s205
      %s208 = sphi 0, %s207
      %s222 = sphi 0, %s208
      %s228 = sphi 0, %s230
      %s231 = sphi 0, %s228
      %s232 = sphi 0, %s231
      %s248 = sphi 0, %s232
    $region4: #{tpu_custom_call.1} parent=1 // loop_header_branch
      %27 = sbr.rel (%p25) target = $region8
    $region5: #{tpu_custom_call.1} parent=1 // loop_body
      %s29 = ssub.s32 %s24, 1
      %s30 = ssub.s32 %s24, 2
      %s31 = sadd.s32 %s24, 1
      %s32 = ssub.s32 %s24, %s31
      %p33 = scmp.eq.s32.totalorder %s32, 0
      %s35 = sadd.s32 %s34, 1
      %s36 = scalar_select %p33, %s34, %s35
      %p39 = pneg %p33
      %p40 = scmp.eq.s32.totalorder %s24, 1
      %p41 = por %p39, %p40
      %p42 = scmp.ne.s32.totalorder %s34, %s37
      %p43 = scmp.eq.s32.totalorder %s24, 0
      %p44 = por %p42, %p43
      %p45 = scmp.ne.s32.totalorder %s34, %s37
      %p46 = scmp.eq.s32.totalorder %s29, 1
      %p47 = por %p45, %p46
      %p48 = scmp.ne.s32.totalorder %s37, %s38
      %p49 = scmp.eq.s32.totalorder %s29, 0
      %p50 = por %p48, %p49
      %p51 = scmp.ne.s32.totalorder %s37, %s38
      %p52 = scmp.eq.s32.totalorder %s30, 1
      %p53 = por %p51, %p52
      %p55 = scmp.ne.s32.totalorder %s38, %s54
      %p56 = scmp.eq.s32.totalorder %s30, 0
      %p57 = por %p55, %p56
      %s59 = sadd.s32 %s58, 1
      %p62 = scmp.eq.s32.totalorder %s24, 1
      %p63 = scmp.ne.s32.totalorder %s58, %s60
      %p64 = scmp.eq.s32.totalorder %s24, 0
      %p65 = por %p63, %p64
      %p66 = scmp.ne.s32.totalorder %s58, %s60
      %p67 = scmp.eq.s32.totalorder %s29, 1
      %p68 = por %p66, %p67
      %p69 = scmp.ne.s32.totalorder %s60, %s61
      %p70 = scmp.eq.s32.totalorder %s29, 0
      %p71 = por %p69, %p70
      %p72 = scmp.ne.s32.totalorder %s60, %s61
      %p73 = scmp.eq.s32.totalorder %s30, 1
      %p74 = por %p72, %p73
      %p76 = scmp.ne.s32.totalorder %s61, %s75
      %p77 = scmp.eq.s32.totalorder %s30, 0
      %p78 = por %p76, %p77
      %s80 = sadd.s32 %s79, 1
      %p83 = scmp.eq.s32.totalorder %s24, 1
      %p84 = scmp.ne.s32.totalorder %s79, %s81
      %p85 = scmp.eq.s32.totalorder %s24, 0
      %p86 = por %p84, %p85
      %p87 = scmp.ne.s32.totalorder %s79, %s81
      %p88 = scmp.eq.s32.totalorder %s29, 1
      %p89 = por %p87, %p88
      %p90 = scmp.ne.s32.totalorder %s81, %s82
      %p91 = scmp.eq.s32.totalorder %s29, 0
      %p92 = por %p90, %p91
      %p93 = scmp.ne.s32.totalorder %s81, %s82
      %p94 = scmp.eq.s32.totalorder %s30, 1
      %p95 = por %p93, %p94
      %p97 = scmp.ne.s32.totalorder %s82, %s96
      %p98 = scmp.eq.s32.totalorder %s30, 0
      %p99 = por %p97, %p98
      %s101 = sadd.s32 %s100, 1
      %p104 = scmp.eq.s32.totalorder %s24, 1
      %p105 = scmp.ne.s32.totalorder %s100, %s102
      %p106 = scmp.eq.s32.totalorder %s24, 0
      %p107 = por %p105, %p106
      %p108 = scmp.ne.s32.totalorder %s100, %s102
      %p109 = scmp.eq.s32.totalorder %s29, 1
      %p110 = por %p108, %p109
      %p111 = scmp.ne.s32.totalorder %s102, %s103
      %p112 = scmp.eq.s32.totalorder %s29, 0
      %p113 = por %p111, %p112
      %p114 = scmp.ne.s32.totalorder %s102, %s103
      %p115 = scmp.eq.s32.totalorder %s30, 1
      %p116 = por %p114, %p115
      %p118 = scmp.ne.s32.totalorder %s103, %s117
      %p119 = scmp.eq.s32.totalorder %s30, 0
      %p120 = por %p118, %p119
      %s122 = sadd.s32 %s121, 1
      %p125 = scmp.eq.s32.totalorder %s24, 1
      %p126 = scmp.ne.s32.totalorder %s121, %s123
      %p127 = scmp.eq.s32.totalorder %s24, 0
      %p128 = por %p126, %p127
      %p129 = scmp.ne.s32.totalorder %s121, %s123
      %p130 = scmp.eq.s32.totalorder %s29, 1
      %p131 = por %p129, %p130
      %p132 = scmp.ne.s32.totalorder %s123, %s124
      %p133 = scmp.eq.s32.totalorder %s29, 0
      %p134 = por %p132, %p133
      %p135 = scmp.ne.s32.totalorder %s123, %s124
      %p136 = scmp.eq.s32.totalorder %s30, 1
      %p137 = por %p135, %p136
      %p139 = scmp.ne.s32.totalorder %s124, %s138
      %p140 = scmp.eq.s32.totalorder %s30, 0
      %p141 = por %p139, %p140
      %s143 = sadd.s32 %s142, 1
      %p146 = scmp.eq.s32.totalorder %s24, 1
      %p147 = scmp.ne.s32.totalorder %s142, %s144
      %p148 = scmp.eq.s32.totalorder %s24, 0
      %p149 = por %p147, %p148
      %p150 = scmp.ne.s32.totalorder %s142, %s144
      %p151 = scmp.eq.s32.totalorder %s29, 1
      %p152 = por %p150, %p151
      %p153 = scmp.ne.s32.totalorder %s144, %s145
      %p154 = scmp.eq.s32.totalorder %s29, 0
      %p155 = por %p153, %p154
      %p156 = scmp.ne.s32.totalorder %s144, %s145
      %p157 = scmp.eq.s32.totalorder %s30, 1
      %p158 = por %p156, %p157
      %p160 = scmp.ne.s32.totalorder %s145, %s159
      %p161 = scmp.eq.s32.totalorder %s30, 0
      %p162 = por %p160, %p161
      %s164 = sadd.s32 %s163, 1
      %p167 = scmp.eq.s32.totalorder %s24, 1
      %p168 = scmp.ne.s32.totalorder %s163, %s165
      %p169 = scmp.eq.s32.totalorder %s24, 0
      %p170 = por %p168, %p169
      %p171 = scmp.ne.s32.totalorder %s163, %s165
      %p172 = scmp.eq.s32.totalorder %s29, 1
      %p173 = por %p171, %p172
      %p174 = scmp.ne.s32.totalorder %s165, %s166
      %p175 = scmp.eq.s32.totalorder %s29, 0
      %p176 = por %p174, %p175
      %p177 = scmp.ne.s32.totalorder %s165, %s166
      %p178 = scmp.eq.s32.totalorder %s30, 1
      %p179 = por %p177, %p178
      %p181 = scmp.ne.s32.totalorder %s166, %s180
      %p182 = scmp.eq.s32.totalorder %s30, 0
      %p183 = por %p181, %p182
      %s185 = sadd.s32 %s184, 1
      %p188 = scmp.eq.s32.totalorder %s24, 1
      %p189 = scmp.ne.s32.totalorder %s184, %s186
      %p190 = scmp.eq.s32.totalorder %s24, 0
      %p191 = por %p189, %p190
      %p192 = scmp.ne.s32.totalorder %s184, %s186
      %p193 = scmp.eq.s32.totalorder %s29, 1
      %p194 = por %p192, %p193
      %p195 = scmp.ne.s32.totalorder %s186, %s187
      %p196 = scmp.eq.s32.totalorder %s29, 0
      %p197 = por %p195, %p196
      %p198 = scmp.ne.s32.totalorder %s186, %s187
      %p199 = scmp.eq.s32.totalorder %s30, 1
      %p200 = por %p198, %p199
      %p202 = scmp.ne.s32.totalorder %s187, %s201
      %p203 = scmp.eq.s32.totalorder %s30, 0
      %p204 = por %p202, %p203
      %s206 = sadd.s32 %s205, 1
      %p209 = scmp.eq.s32.totalorder %s24, 1
      %p210 = scmp.ne.s32.totalorder %s205, %s207
      %p211 = scmp.eq.s32.totalorder %s24, 0
      %p212 = por %p210, %p211
      %p213 = scmp.ne.s32.totalorder %s205, %s207
      %p214 = scmp.eq.s32.totalorder %s29, 1
      %p215 = por %p213, %p214
      %p216 = scmp.ne.s32.totalorder %s207, %s208
      %p217 = scmp.eq.s32.totalorder %s29, 0
      %p218 = por %p216, %p217
      %p219 = scmp.ne.s32.totalorder %s207, %s208
      %p220 = scmp.eq.s32.totalorder %s30, 1
      %p221 = por %p219, %p220
      %p223 = scmp.ne.s32.totalorder %s208, %s222
      %p224 = scmp.eq.s32.totalorder %s30, 0
      %p225 = por %p223, %p224
      %s226 = ssub.s32 %s24, %s31
      %p227 = scmp.eq.s32.totalorder %s226, 0
      %s229 = sadd.s32 %s228, 1
      %s230 = scalar_select %p227, %s228, %s229
      %p233 = pneg %p227
      %p234 = scmp.eq.s32.totalorder %s24, 1
      %p235 = por %p233, %p234
      %p236 = scmp.ne.s32.totalorder %s228, %s231
      %p237 = scmp.eq.s32.totalorder %s24, 0
      %p238 = por %p236, %p237
      %p239 = scmp.ne.s32.totalorder %s228, %s231
      %p240 = scmp.eq.s32.totalorder %s29, 1
      %p241 = por %p239, %p240
      %p242 = scmp.ne.s32.totalorder %s231, %s232
      %p243 = scmp.eq.s32.totalorder %s29, 0
      %p244 = por %p242, %p243
      %p245 = scmp.ne.s32.totalorder %s231, %s232
      %p246 = scmp.eq.s32.totalorder %s30, 1
      %p247 = por %p245, %p246
      %p249 = scmp.ne.s32.totalorder %s232, %s248
      %p250 = scmp.eq.s32.totalorder %s30, 0
      %p251 = por %p249, %p250
      %p252 = scmp.le.s32.totalorder 1, %s24
      %p253 = scmp.lt.s32.totalorder %s24, 3
      %p254 = pnand %p252, %p253
      %p255 = pneg %p254
      // Predicated region
      $region9: #{tpu_custom_call.1} parent=5 // pred_check
        _
      $region10: #{tpu_custom_call.1} parent=5 // pred_check_branch
        %257 = sbr.rel (%p254) target = $region12
      $region11: #{tpu_custom_call.1} parent=5 // pred_region
        %s258 = ssub.s32 %s24, 1
        // Predicated region
        $region13: #{tpu_custom_call.1} parent=11 // pred_check
          %p259 = pneg %p71
        $region14: #{tpu_custom_call.1} parent=11 // pred_check_branch
          %261 = sbr.rel (%p259) target = $region16
        $region15: #{tpu_custom_call.1} parent=11 // pred_region
          %263 = vsyncadd [#allocation8], 0
          %s264 = sshll.u32 %s1, 4
          %s265 = int_to_ptr.hbm [resolvable:$true] %s264
          %s266 = sshll.u32 [#allocation7], 4
          %s267 = int_to_ptr.vmem [resolvable:$true] %s266
          %272 = dma.hbm_to_vmem [thread:$0]  %s265, 2048, %s267, [#allocation8], 128, 128, 8
        $region16: #{tpu_custom_call.1} parent=11 // pred_fallthru
          _
        // Predicated region
        $region17: #{tpu_custom_call.1} parent=11 // pred_check
          %p273 = pneg %p92
        $region18: #{tpu_custom_call.1} parent=11 // pred_check_branch
          %275 = sbr.rel (%p273) target = $region20
        $region19: #{tpu_custom_call.1} parent=11 // pred_region
          %277 = vsyncadd [#allocation8], 0
          %s279 = sshll.u32 %s2, 4
          %s280 = int_to_ptr.hbm [resolvable:$true] %s279
          %s281 = sshll.u32 [#allocation9], 4
          %s282 = int_to_ptr.vmem [resolvable:$true] %s281
          %284 = dma.hbm_to_vmem [thread:$0]  %s280, 16, %s282, [#allocation8]
        $region20: #{tpu_custom_call.1} parent=11 // pred_fallthru
          _
        // Predicated region
        $region21: #{tpu_custom_call.1} parent=11 // pred_check
          %p285 = pneg %p113
        $region22: #{tpu_custom_call.1} parent=11 // pred_check_branch
          %287 = sbr.rel (%p285) target = $region24
        $region23: #{tpu_custom_call.1} parent=11 // pred_region
          %289 = vsyncadd [#allocation11], 0
          %s290 = sshll.u32 %s3, 4
          %s291 = int_to_ptr.hbm [resolvable:$true] %s290
          %s292 = sshll.u32 [#allocation10], 4
          %s293 = int_to_ptr.vmem [resolvable:$true] %s292
          %298 = dma.hbm_to_vmem [thread:$0]  %s291, 6144, %s293, [#allocation11], 256, 256, 16
        $region24: #{tpu_custom_call.1} parent=11 // pred_fallthru
          _
        // Predicated region
        $region25: #{tpu_custom_call.1} parent=11 // pred_check
          %p299 = pneg %p134
        $region26: #{tpu_custom_call.1} parent=11 // pred_check_branch
          %301 = sbr.rel (%p299) target = $region28
        $region27: #{tpu_custom_call.1} parent=11 // pred_region
          _
        $region28: #{tpu_custom_call.1} parent=11 // pred_fallthru
          _
        // Predicated region
        $region29: #{tpu_custom_call.1} parent=11 // pred_check
          %p302 = pneg %p155
        $region30: #{tpu_custom_call.1} parent=11 // pred_check_branch
          %304 = sbr.rel (%p302) target = $region32
        $region31: #{tpu_custom_call.1} parent=11 // pred_region
          _
        $region32: #{tpu_custom_call.1} parent=11 // pred_fallthru
          _
        // Predicated region
        $region33: #{tpu_custom_call.1} parent=11 // pred_check
          %p305 = pneg %p176
        $region34: #{tpu_custom_call.1} parent=11 // pred_check_branch
          %307 = sbr.rel (%p305) target = $region36
        $region35: #{tpu_custom_call.1} parent=11 // pred_region
          %309 = vsyncadd [#allocation11], 0
          %s310 = sshll.u32 %s6, 4
          %s311 = int_to_ptr.hbm [resolvable:$true] %s310
          %s312 = sshll.u32 [#allocation12], 4
          %s313 = int_to_ptr.vmem [resolvable:$true] %s312
          %318 = dma.hbm_to_vmem [thread:$0]  %s311, 24576, %s313, [#allocation11], 256, 256, 16
        $region36: #{tpu_custom_call.1} parent=11 // pred_fallthru
          _
        // Predicated region
        $region37: #{tpu_custom_call.1} parent=11 // pred_check
          %p319 = pneg %p197
        $region38: #{tpu_custom_call.1} parent=11 // pred_check_branch
          %321 = sbr.rel (%p319) target = $region40
        $region39: #{tpu_custom_call.1} parent=11 // pred_region
          _
        $region40: #{tpu_custom_call.1} parent=11 // pred_fallthru
          _
        // Predicated region
        $region41: #{tpu_custom_call.1} parent=11 // pred_check
          %p322 = pneg %p218
        $region42: #{tpu_custom_call.1} parent=11 // pred_check_branch
          %324 = sbr.rel (%p322) target = $region44
        $region43: #{tpu_custom_call.1} parent=11 // pred_region
          %326 = vsyncadd [#allocation14], 0
          %s328 = sshll.u32 %s8, 4
          %s329 = int_to_ptr.hbm [resolvable:$true] %s328
          %s330 = sshll.u32 [#allocation13], 4
          %s331 = int_to_ptr.vmem [resolvable:$true] %s330
          %333 = dma.hbm_to_vmem [thread:$0]  %s329, 32, %s331, [#allocation14]
        $region44: #{tpu_custom_call.1} parent=11 // pred_fallthru
          _
      $region12: #{tpu_custom_call.1} parent=5 // pred_fallthru
        _
      %p334 = scmp.lt.s32.totalorder %s24, 2
      // Predicated region
      $region45: #{tpu_custom_call.1} parent=5 // pred_check
        %p335 = pneg %p334
      $region46: #{tpu_custom_call.1} parent=5 // pred_check_branch
        %337 = sbr.rel (%p335) target = $region48
      $region47: #{tpu_custom_call.1} parent=5 // pred_region
        // Predicated region
        $region49: #{tpu_custom_call.1} parent=47 // pred_check
          %p338 = pneg %p44
        $region50: #{tpu_custom_call.1} parent=47 // pred_check_branch
          %340 = sbr.rel (%p338) target = $region52
        $region51: #{tpu_custom_call.1} parent=47 // pred_region
          %s341 = sand.u32 %s34, 1
          %s342 = scalar_lea.sflag [#allocation5], %s341
          %s343 = sand.u32 %s34, 1
          %s344 = smul.addr %s343, 16
          %s345 = scalar_lea.vmem [#allocation4], %s344
          %s346 = smul.u32 2, %s24
          %348 = vsyncadd %s342, 0
          %s349 = smul.addr %s346, 8
          %s350 = scalar_lea.hbm %s0, %s349
          %s351 = sshll.u32 %s350, 4
          %s352 = int_to_ptr.hbm [resolvable:$true] %s351
          %s353 = sshll.u32 %s345, 4
          %s354 = int_to_ptr.vmem [resolvable:$true] %s353
          %359 = dma.hbm_to_vmem [thread:$0]  %s352, 256, %s354, %s342, 128, 128, 8
        $region52: #{tpu_custom_call.1} parent=47 // pred_fallthru
          _
      $region48: #{tpu_custom_call.1} parent=5 // pred_fallthru
        _
      %p360 = scmp.le.s32.totalorder 1, %s24
      %p361 = scmp.lt.s32.totalorder %s24, 3
      %p362 = pnand %p360, %p361
      %p363 = pneg %p362
      // Predicated region
      $region53: #{tpu_custom_call.1} parent=5 // pred_check
        _
      $region54: #{tpu_custom_call.1} parent=5 // pred_check_branch
        %365 = sbr.rel (%p362) target = $region56
      $region55: #{tpu_custom_call.1} parent=5 // pred_region
        %s366 = ssub.s32 %s24, 1
        %s367 = sand.u32 %s37, 1
        %s368 = scalar_lea.sflag [#allocation5], %s367
        %s369 = sand.u32 %s37, 1
        %s370 = smul.addr %s369, 16
        %s371 = scalar_lea.vmem [#allocation4], %s370
        // Predicated region
        $region57: #{tpu_custom_call.1} parent=55 // pred_check
          %p372 = pneg %p50
        $region58: #{tpu_custom_call.1} parent=55 // pred_check_branch
          %374 = sbr.rel (%p372) target = $region60
        $region59: #{tpu_custom_call.1} parent=55 // pred_region
          %376 = dma.done %s368, 256
        $region60: #{tpu_custom_call.1} parent=55 // pred_fallthru
          _
        // Predicated region
        $region61: #{tpu_custom_call.1} parent=55 // pred_check
          %p377 = pneg %p71
        $region62: #{tpu_custom_call.1} parent=55 // pred_check_branch
          %379 = sbr.rel (%p377) target = $region64
        $region63: #{tpu_custom_call.1} parent=55 // pred_region
          %381 = dma.done [#allocation8], 2048
        $region64: #{tpu_custom_call.1} parent=55 // pred_fallthru
          _
        // Predicated region
        $region65: #{tpu_custom_call.1} parent=55 // pred_check
          %p382 = pneg %p92
        $region66: #{tpu_custom_call.1} parent=55 // pred_check_branch
          %384 = sbr.rel (%p382) target = $region68
        $region67: #{tpu_custom_call.1} parent=55 // pred_region
          %386 = dma.done [#allocation8], 16
        $region68: #{tpu_custom_call.1} parent=55 // pred_fallthru
          _
        // Predicated region
        $region69: #{tpu_custom_call.1} parent=55 // pred_check
          %p387 = pneg %p113
        $region70: #{tpu_custom_call.1} parent=55 // pred_check_branch
          %389 = sbr.rel (%p387) target = $region72
        $region71: #{tpu_custom_call.1} parent=55 // pred_region
          %391 = dma.done [#allocation11], 6144
        $region72: #{tpu_custom_call.1} parent=55 // pred_fallthru
          _
        // Predicated region
        $region73: #{tpu_custom_call.1} parent=55 // pred_check
          %p392 = pneg %p176
        $region74: #{tpu_custom_call.1} parent=55 // pred_check_branch
          %394 = sbr.rel (%p392) target = $region76
        $region75: #{tpu_custom_call.1} parent=55 // pred_region
          %396 = dma.done [#allocation11], 24576
        $region76: #{tpu_custom_call.1} parent=55 // pred_fallthru
          _
        // Predicated region
        $region77: #{tpu_custom_call.1} parent=55 // pred_check
          %p397 = pneg %p218
        $region78: #{tpu_custom_call.1} parent=55 // pred_check_branch
          %399 = sbr.rel (%p397) target = $region80
        $region79: #{tpu_custom_call.1} parent=55 // pred_region
          %401 = dma.done [#allocation14], 32
        $region80: #{tpu_custom_call.1} parent=55 // pred_fallthru
          _
        %s402 = sand.u32 %s37, 1
        %s403 = scalar_lea.sflag [#allocation5], %s402
        %s404 = sand.u32 %s37, 1
        %s405 = smul.addr %s404, 16
        %s406 = scalar_lea.vmem [#allocation4], %s405
        %p407 = pneg %p50
        %p408 = pneg %p47
        %p409 = pneg %p71
        %p410 = pneg %p68
        %p411 = pneg %p92
        %p412 = pneg %p89
        %p413 = pneg %p113
        %p414 = pneg %p110
        %p415 = pneg %p134
        %p416 = pneg %p131
        %p417 = pneg %p155
        %p418 = pneg %p152
        %p419 = pneg %p176
        %p420 = pneg %p173
        %p421 = pneg %p197
        %p422 = pneg %p194
        %p423 = pneg %p218
        %p424 = pneg %p215
        %p425 = pneg %p244
        %p426 = pneg %p241
        %s427 = sand.u32 %s231, 1
        %s428 = scalar_lea.sflag [#allocation6], %s427
        %s429 = sand.u32 %s231, 1
        %s430 = smul.addr %s429, 64
        %s431 = scalar_lea.vmem [#allocation15], %s430
        %s432 = smul.u32 2, %s29
        %s433 = smul.u32 2, %s29
        %vm434 = vcmask 516096
        %435 = vst.msk [vmem:[#allocation2] sm:$0x1] %vm434, 0.0
        %s436 = scalar_lea.vmem [#allocation2], 24
        %437 = vst.msk [vmem:[%s436 + $0x10] sm:$0x1] %vm434, 0.0
        %v438 = vlaneseq
        %vm439 = vcmp.ge.s32.totalorder %v438, 0
        %vm440 = vcmp.lt.s32.totalorder %v438, 256
        %vm441 = vmand %vm439, %vm440
        %442 = vst.msk [vmem:[#allocation3] ss:$8 sm:$0x3] %vm441, 0.0
        %443 = vst.msk [vmem:[#allocation3] ss:$8 sm:$0x0] %vm441, 0.0
        %s444 = scalar_lea.vmem [#allocation3], 48
        %s445 = scalar_lea.vmem %s444, 32 [#allocation3]
        %446 = vst.msk [vmem:[%s445] ss:$8 sm:$0x3] %vm441, 0.0
        %447 = vst.msk [vmem:[%s445] ss:$8 sm:$0x0] %vm441, 0.0
        %v448 = vld [vmem:[%s371] sm:$0xff]
        %v449 = vld [vmem:[%s371 + $0x8] sm:$0xff]
        %v450 = vld [vmem:[#allocation7] sm:$0xff]
        %v451 = vld [vmem:[#allocation7 + $0x8] sm:$0xff]
        %v452 = vld [vmem:[#allocation7 + $0x10] sm:$0xff]
        %v453 = vld [vmem:[#allocation7 + $0x18] sm:$0xff]
        %v454 = vld [vmem:[#allocation7 + $0x20] sm:$0xff]
        %v455 = vld [vmem:[#allocation7 + $0x28] sm:$0xff]
        %v456 = vld [vmem:[#allocation7 + $0x30] sm:$0xff]
        %v457 = vld [vmem:[#allocation7 + $0x38] sm:$0xff]
        %v458 = vld [vmem:[#allocation9] sm:$0x1]
        %v460 = vperm.slane %v458, 0
        %vm462 = vcmask 523264
        %v464 = vsel %vm462, %v448, 0
        %v467 = vsel %vm462, %v449, 0
        %469 = vmatpush.msra.mxu0 0.0
        %470 = vmatpush.msra.mxu0 0.0
        %471 = vmatpush.msra.mxu0 0.0
        %472 = vmatpush.msra.mxu0 0.0
        %473 = vmatpush.msra.mxu0 0.0
        %474 = vmatpush.msra.mxu0 0.0
        %475 = vmatpush.msra.mxu0 0.0
        %476 = vmatpush.msra.mxu0 0.0
        %477 = vmatpush.msra.mxu0 %v457
        %478 = vmatpush.msra.mxu0 %v456
        %479 = vmatpush.msra.mxu0 %v455
        %480 = vmatpush.msra.mxu0 %v454
        %481 = vmatpush.msra.mxu0 %v453
        %482 = vmatpush.msra.mxu0 %v452
        %483 = vmatpush.msra.mxu0 %v451
        %484 = vmatpush.msra.mxu0 %v450
        %485 = vmatmul.f32.gmra.mxu0 %v464
        %v486 = vpop.f32.mrf.mxu0
        %v487 = vadd.f32 %v460, %v486
        %488 = vmatmul.f32.gmra.mxu0 %v467
        %v489 = vpop.f32.mrf.mxu0
        %v490 = vadd.f32 %v460, %v489
        %491 = vdwg.mxu0
        %492 = vst.msk [vmem:[%s436] sm:$0xff] %vm462, %v487
        %493 = vst.msk [vmem:[%s436 + $0x8] sm:$0xff] %vm462, %v490
        %s494 = scalar_lea.vmem [#allocation7], 64
        %v495 = vld [vmem:[%s494] sm:$0xff]
        %v496 = vld [vmem:[%s494 + $0x8] sm:$0xff]
        %v497 = vld [vmem:[%s494 + $0x10] sm:$0xff]
        %v498 = vld [vmem:[%s494 + $0x18] sm:$0xff]
        %v499 = vld [vmem:[%s494 + $0x20] sm:$0xff]
        %v500 = vld [vmem:[%s494 + $0x28] sm:$0xff]
        %v501 = vld [vmem:[%s494 + $0x30] sm:$0xff]
        %v502 = vld [vmem:[%s494 + $0x38] sm:$0xff]
        %v503 = vld [vmem:[#allocation9] sm:$0x1]
        %v505 = vperm.slane %v503, 0
        %507 = vmatpush.msra.mxu0 0.0
        %508 = vmatpush.msra.mxu0 0.0
        %509 = vmatpush.msra.mxu0 0.0
        %510 = vmatpush.msra.mxu0 0.0
        %511 = vmatpush.msra.mxu0 0.0
        %512 = vmatpush.msra.mxu0 0.0
        %513 = vmatpush.msra.mxu0 0.0
        %514 = vmatpush.msra.mxu0 0.0
        %515 = vmatpush.msra.mxu0 %v502
        %516 = vmatpush.msra.mxu0 %v501
        %517 = vmatpush.msra.mxu0 %v500
        %518 = vmatpush.msra.mxu0 %v499
        %519 = vmatpush.msra.mxu0 %v498
        %520 = vmatpush.msra.mxu0 %v497
        %521 = vmatpush.msra.mxu0 %v496
        %522 = vmatpush.msra.mxu0 %v495
        %523 = vmatmul.f32.gmra.mxu0 %v464
        %v524 = vpop.f32.mrf.mxu0
        %v525 = vadd.f32 %v505, %v524
        %526 = vmatmul.f32.gmra.mxu0 %v467
        %v527 = vpop.f32.mrf.mxu0
        %v528 = vadd.f32 %v505, %v527
        %529 = vdwg.mxu0
        %530 = vst.msk [vmem:[#allocation2 + $0x1] sm:$0xff] %vm462, %v525
        %531 = vst.msk [vmem:[#allocation2 + $0x9] sm:$0xff] %vm462, %v528
        %v532 = vld [vmem:[#allocation2] sm:$0xff]
        %v533 = vld [vmem:[#allocation2 + $0x8] sm:$0xff]
        %v534 = vld [vmem:[#allocation10] sm:$0xff]
        %v535 = vld [vmem:[#allocation10 + $0x8] sm:$0xff]
        %v536 = vld [vmem:[#allocation10 + $0x10] sm:$0xff]
        %v537 = vld [vmem:[#allocation10 + $0x18] sm:$0xff]
        %v538 = vld [vmem:[#allocation10 + $0x20] sm:$0xff]
        %v539 = vld [vmem:[#allocation10 + $0x28] sm:$0xff]
        %v540 = vld [vmem:[#allocation10 + $0x30] sm:$0xff]
        %v541 = vld [vmem:[#allocation10 + $0x38] sm:$0xff]
        %v542 = vld [vmem:[#allocation10 + $0x40] sm:$0xff]
        %v543 = vld [vmem:[#allocation10 + $0x48] sm:$0xff]
        %v544 = vld [vmem:[#allocation10 + $0x50] sm:$0xff]
        %v545 = vld [vmem:[#allocation10 + $0x58] sm:$0xff]
        %v546 = vld [vmem:[#allocation10 + $0x60] sm:$0xff]
        %v547 = vld [vmem:[#allocation10 + $0x68] sm:$0xff]
        %v548 = vld [vmem:[#allocation10 + $0x70] sm:$0xff]
        %v549 = vld [vmem:[#allocation10 + $0x78] sm:$0xff]
        %v550 = vld [vmem:[%s436] sm:$0xff]
        %v551 = vld [vmem:[%s436 + $0x8] sm:$0xff]
        %s552 = scalar_lea.vmem [#allocation10], 128
        %v553 = vld [vmem:[%s552] sm:$0xff]
        %v554 = vld [vmem:[%s552 + $0x8] sm:$0xff]
        %v555 = vld [vmem:[%s552 + $0x10] sm:$0xff]
        %v556 = vld [vmem:[%s552 + $0x18] sm:$0xff]
        %v557 = vld [vmem:[%s552 + $0x20] sm:$0xff]
        %v558 = vld [vmem:[%s552 + $0x28] sm:$0xff]
        %v559 = vld [vmem:[%s552 + $0x30] sm:$0xff]
        %v560 = vld [vmem:[%s552 + $0x38] sm:$0xff]
        %v561 = vld [vmem:[%s552 + $0x40] sm:$0xff]
        %v562 = vld [vmem:[%s552 + $0x48] sm:$0xff]
        %v563 = vld [vmem:[%s552 + $0x50] sm:$0xff]
        %v564 = vld [vmem:[%s552 + $0x58] sm:$0xff]
        %v565 = vld [vmem:[%s552 + $0x60] sm:$0xff]
        %v566 = vld [vmem:[%s552 + $0x68] sm:$0xff]
        %v567 = vld [vmem:[%s552 + $0x70] sm:$0xff]
        %v568 = vld [vmem:[%s552 + $0x78] sm:$0xff]
        %v570 = vsel %vm462, %v550, 0
        %v573 = vsel %vm462, %v551, 0
        %575 = vmatpush.msra.mxu0 0.0
        %576 = vmatpush.msra.mxu0 0.0
        %577 = vmatpush.msra.mxu0 0.0
        %578 = vmatpush.msra.mxu0 0.0
        %579 = vmatpush.msra.mxu0 0.0
        %580 = vmatpush.msra.mxu0 0.0
        %581 = vmatpush.msra.mxu0 0.0
        %582 = vmatpush.msra.mxu0 0.0
        %583 = vmatpush.msra.mxu0 %v567
        %584 = vmatpush.msra.mxu0 %v565
        %585 = vmatpush.msra.mxu0 %v563
        %586 = vmatpush.msra.mxu0 %v561
        %587 = vmatpush.msra.mxu0 %v559
        %588 = vmatpush.msra.mxu0 %v557
        %589 = vmatpush.msra.mxu0 %v555
        %590 = vmatpush.msra.mxu0 %v553
        %591 = vmatmul.f32.gmra.mxu0 %v570
        %v592 = vpop.f32.mrf.mxu0
        %v593 = vadd.f32 0.0, %v592
        %594 = vmatmul.f32.gmra.mxu0 %v573
        %v595 = vpop.f32.mrf.mxu0
        %v596 = vadd.f32 0.0, %v595
        %597 = vdwg.mxu0
        %598 = vmatpush.msra.mxu0 0.0
        %599 = vmatpush.msra.mxu0 0.0
        %600 = vmatpush.msra.mxu0 0.0
        %601 = vmatpush.msra.mxu0 0.0
        %602 = vmatpush.msra.mxu0 0.0
        %603 = vmatpush.msra.mxu0 0.0
        %604 = vmatpush.msra.mxu0 0.0
        %605 = vmatpush.msra.mxu0 0.0
        %606 = vmatpush.msra.mxu0 %v568
        %607 = vmatpush.msra.mxu0 %v566
        %608 = vmatpush.msra.mxu0 %v564
        %609 = vmatpush.msra.mxu0 %v562
        %610 = vmatpush.msra.mxu0 %v560
        %611 = vmatpush.msra.mxu0 %v558
        %612 = vmatpush.msra.mxu0 %v556
        %613 = vmatpush.msra.mxu0 %v554
        %614 = vmatmul.f32.gmra.mxu0 %v570
        %v615 = vpop.f32.mrf.mxu0
        %v616 = vadd.f32 0.0, %v615
        %617 = vmatmul.f32.gmra.mxu0 %v573
        %v618 = vpop.f32.mrf.mxu0
        %v619 = vadd.f32 0.0, %v618
        %620 = vdwg.mxu0
        %v622 = vsel %vm462, %v532, 0
        %v625 = vsel %vm462, %v533, 0
        %627 = vmatpush.msra.mxu0 0.0
        %628 = vmatpush.msra.mxu0 0.0
        %629 = vmatpush.msra.mxu0 0.0
        %630 = vmatpush.msra.mxu0 0.0
        %631 = vmatpush.msra.mxu0 0.0
        %632 = vmatpush.msra.mxu0 0.0
        %633 = vmatpush.msra.mxu0 0.0
        %634 = vmatpush.msra.mxu0 0.0
        %635 = vmatpush.msra.mxu0 %v548
        %636 = vmatpush.msra.mxu0 %v546
        %637 = vmatpush.msra.mxu0 %v544
        %638 = vmatpush.msra.mxu0 %v542
        %639 = vmatpush.msra.mxu0 %v540
        %640 = vmatpush.msra.mxu0 %v538
        %641 = vmatpush.msra.mxu0 %v536
        %642 = vmatpush.msra.mxu0 %v534
        %643 = vmatmul.f32.gmra.mxu0 %v622
        %v644 = vpop.f32.mrf.mxu0
        %v645 = vadd.f32 %v593, %v644
        %646 = vmatmul.f32.gmra.mxu0 %v625
        %v647 = vpop.f32.mrf.mxu0
        %v648 = vadd.f32 %v596, %v647
        %649 = vdwg.mxu0
        %650 = vmatpush.msra.mxu0 0.0
        %651 = vmatpush.msra.mxu0 0.0
        %652 = vmatpush.msra.mxu0 0.0
        %653 = vmatpush.msra.mxu0 0.0
        %654 = vmatpush.msra.mxu0 0.0
        %655 = vmatpush.msra.mxu0 0.0
        %656 = vmatpush.msra.mxu0 0.0
        %657 = vmatpush.msra.mxu0 0.0
        %658 = vmatpush.msra.mxu0 %v549
        %659 = vmatpush.msra.mxu0 %v547
        %660 = vmatpush.msra.mxu0 %v545
        %661 = vmatpush.msra.mxu0 %v543
        %662 = vmatpush.msra.mxu0 %v541
        %663 = vmatpush.msra.mxu0 %v539
        %664 = vmatpush.msra.mxu0 %v537
        %665 = vmatpush.msra.mxu0 %v535
        %666 = vmatmul.f32.gmra.mxu0 %v622
        %v667 = vpop.f32.mrf.mxu0
        %v668 = vadd.f32 %v616, %v667
        %669 = vmatmul.f32.gmra.mxu0 %v625
        %v670 = vpop.f32.mrf.mxu0
        %v671 = vadd.f32 %v619, %v670
        %672 = vdwg.mxu0
        %v673 = vld [vmem:[#allocation2 + $0x1] sm:$0xff]
        %v674 = vld [vmem:[#allocation2 + $0x9] sm:$0xff]
        %s675 = scalar_lea.vmem [#allocation10], 256
        %v676 = vld [vmem:[%s675] sm:$0xff]
        %v677 = vld [vmem:[%s675 + $0x8] sm:$0xff]
        %v678 = vld [vmem:[%s675 + $0x10] sm:$0xff]
        %v679 = vld [vmem:[%s675 + $0x18] sm:$0xff]
        %v680 = vld [vmem:[%s675 + $0x20] sm:$0xff]
        %v681 = vld [vmem:[%s675 + $0x28] sm:$0xff]
        %v682 = vld [vmem:[%s675 + $0x30] sm:$0xff]
        %v683 = vld [vmem:[%s675 + $0x38] sm:$0xff]
        %v684 = vld [vmem:[%s675 + $0x40] sm:$0xff]
        %v685 = vld [vmem:[%s675 + $0x48] sm:$0xff]
        %v686 = vld [vmem:[%s675 + $0x50] sm:$0xff]
        %v687 = vld [vmem:[%s675 + $0x58] sm:$0xff]
        %v688 = vld [vmem:[%s675 + $0x60] sm:$0xff]
        %v689 = vld [vmem:[%s675 + $0x68] sm:$0xff]
        %v690 = vld [vmem:[%s675 + $0x70] sm:$0xff]
        %v691 = vld [vmem:[%s675 + $0x78] sm:$0xff]
        %v693 = vsel %vm462, %v673, 0
        %v696 = vsel %vm462, %v674, 0
        %698 = vmatpush.msra.mxu0 0.0
        %699 = vmatpush.msra.mxu0 0.0
        %700 = vmatpush.msra.mxu0 0.0
        %701 = vmatpush.msra.mxu0 0.0
        %702 = vmatpush.msra.mxu0 0.0
        %703 = vmatpush.msra.mxu0 0.0
        %704 = vmatpush.msra.mxu0 0.0
        %705 = vmatpush.msra.mxu0 0.0
        %706 = vmatpush.msra.mxu0 %v690
        %707 = vmatpush.msra.mxu0 %v688
        %708 = vmatpush.msra.mxu0 %v686
        %709 = vmatpush.msra.mxu0 %v684
        %710 = vmatpush.msra.mxu0 %v682
        %711 = vmatpush.msra.mxu0 %v680
        %712 = vmatpush.msra.mxu0 %v678
        %713 = vmatpush.msra.mxu0 %v676
        %714 = vmatmul.f32.gmra.mxu0 %v693
        %v715 = vpop.f32.mrf.mxu0
        %v716 = vadd.f32 0.0, %v715
        %717 = vmatmul.f32.gmra.mxu0 %v696
        %v718 = vpop.f32.mrf.mxu0
        %v719 = vadd.f32 0.0, %v718
        %720 = vdwg.mxu0
        %721 = vmatpush.msra.mxu0 0.0
        %722 = vmatpush.msra.mxu0 0.0
        %723 = vmatpush.msra.mxu0 0.0
        %724 = vmatpush.msra.mxu0 0.0
        %725 = vmatpush.msra.mxu0 0.0
        %726 = vmatpush.msra.mxu0 0.0
        %727 = vmatpush.msra.mxu0 0.0
        %728 = vmatpush.msra.mxu0 0.0
        %729 = vmatpush.msra.mxu0 %v691
        %730 = vmatpush.msra.mxu0 %v689
        %731 = vmatpush.msra.mxu0 %v687
        %732 = vmatpush.msra.mxu0 %v685
        %733 = vmatpush.msra.mxu0 %v683
        %734 = vmatpush.msra.mxu0 %v681
        %735 = vmatpush.msra.mxu0 %v679
        %736 = vmatpush.msra.mxu0 %v677
        %737 = vmatmul.f32.gmra.mxu0 %v693
        %v738 = vpop.f32.mrf.mxu0
        %v739 = vadd.f32 0.0, %v738
        %740 = vmatmul.f32.gmra.mxu0 %v696
        %v741 = vpop.f32.mrf.mxu0
        %v742 = vadd.f32 0.0, %v741
        %743 = vdwg.mxu0
        %v744 = vadd.f32 %v645, %v716
        %v745 = vadd.f32 %v668, %v739
        %v746 = vadd.f32 %v648, %v719
        %v747 = vadd.f32 %v671, %v742
        %v748 = vld [vmem:[%s4] sm:$0x3]
        %v750 = vperm.slane %v748, 0
        %v751 = vperm.slane %v748, 1
        %v754 = vmul.f32 %v744, %v750
        %v755 = vmul.f32 %v745, %v751
        %v756 = vmul.f32 %v746, %v750
        %v757 = vmul.f32 %v747, %v751
        %v758 = vld [vmem:[%s5] sm:$0x3]
        %v760 = vperm.slane %v758, 0
        %v761 = vperm.slane %v758, 1
        %v764 = vadd.f32 %v754, %v760
        %v765 = vadd.f32 %v755, %v761
        %v766 = vadd.f32 %v756, %v760
        %v767 = vadd.f32 %v757, %v761
        %vm768 = vcmp.gt.f32.partialorder %v764, 0.0
        %vm769 = vcmp.gt.f32.partialorder %v765, 0.0
        %vm770 = vcmp.gt.f32.partialorder %v766, 0.0
        %vm771 = vcmp.gt.f32.partialorder %v767, 0.0
        %v772 = vmul.f32 %v764, 0.01
        %v773 = vmul.f32 %v765, 0.01
        %v774 = vmul.f32 %v766, 0.01
        %v775 = vmul.f32 %v767, 0.01
        %v776 = vsel %vm768, %v764, %v772
        %v777 = vsel %vm769, %v765, %v773
        %v778 = vsel %vm770, %v766, %v774
        %v779 = vsel %vm771, %v767, %v775
        %780 = vst [vmem:[%s444] sm:$0xff] %v776
        %781 = vst [vmem:[%s444 + $0x8] sm:$0xff] %v777
        %782 = vst [vmem:[%s444 + $0x10] sm:$0xff] %v778
        %783 = vst [vmem:[%s444 + $0x18] sm:$0xff] %v779
        %v784 = vld [vmem:[%s436] sm:$0xff]
        %v785 = vld [vmem:[%s436 + $0x8] sm:$0xff]
        %v786 = vld [vmem:[#allocation10] sm:$0xff]
        %v787 = vld [vmem:[#allocation10 + $0x8] sm:$0xff]
        %v788 = vld [vmem:[#allocation10 + $0x10] sm:$0xff]
        %v789 = vld [vmem:[#allocation10 + $0x18] sm:$0xff]
        %v790 = vld [vmem:[#allocation10 + $0x20] sm:$0xff]
        %v791 = vld [vmem:[#allocation10 + $0x28] sm:$0xff]
        %v792 = vld [vmem:[#allocation10 + $0x30] sm:$0xff]
        %v793 = vld [vmem:[#allocation10 + $0x38] sm:$0xff]
        %v794 = vld [vmem:[#allocation10 + $0x40] sm:$0xff]
        %v795 = vld [vmem:[#allocation10 + $0x48] sm:$0xff]
        %v796 = vld [vmem:[#allocation10 + $0x50] sm:$0xff]
        %v797 = vld [vmem:[#allocation10 + $0x58] sm:$0xff]
        %v798 = vld [vmem:[#allocation10 + $0x60] sm:$0xff]
        %v799 = vld [vmem:[#allocation10 + $0x68] sm:$0xff]
        %v800 = vld [vmem:[#allocation10 + $0x70] sm:$0xff]
        %v801 = vld [vmem:[#allocation10 + $0x78] sm:$0xff]
        %v802 = vld [vmem:[#allocation2 + $0x1] sm:$0xff]
        %v803 = vld [vmem:[#allocation2 + $0x9] sm:$0xff]
        %v804 = vld [vmem:[%s552] sm:$0xff]
        %v805 = vld [vmem:[%s552 + $0x8] sm:$0xff]
        %v806 = vld [vmem:[%s552 + $0x10] sm:$0xff]
        %v807 = vld [vmem:[%s552 + $0x18] sm:$0xff]
        %v808 = vld [vmem:[%s552 + $0x20] sm:$0xff]
        %v809 = vld [vmem:[%s552 + $0x28] sm:$0xff]
        %v810 = vld [vmem:[%s552 + $0x30] sm:$0xff]
        %v811 = vld [vmem:[%s552 + $0x38] sm:$0xff]
        %v812 = vld [vmem:[%s552 + $0x40] sm:$0xff]
        %v813 = vld [vmem:[%s552 + $0x48] sm:$0xff]
        %v814 = vld [vmem:[%s552 + $0x50] sm:$0xff]
        %v815 = vld [vmem:[%s552 + $0x58] sm:$0xff]
        %v816 = vld [vmem:[%s552 + $0x60] sm:$0xff]
        %v817 = vld [vmem:[%s552 + $0x68] sm:$0xff]
        %v818 = vld [vmem:[%s552 + $0x70] sm:$0xff]
        %v819 = vld [vmem:[%s552 + $0x78] sm:$0xff]
        %v821 = vsel %vm462, %v802, 0
        %v824 = vsel %vm462, %v803, 0
        %826 = vmatpush.msra.mxu0 0.0
        %827 = vmatpush.msra.mxu0 0.0
        %828 = vmatpush.msra.mxu0 0.0
        %829 = vmatpush.msra.mxu0 0.0
        %830 = vmatpush.msra.mxu0 0.0
        %831 = vmatpush.msra.mxu0 0.0
        %832 = vmatpush.msra.mxu0 0.0
        %833 = vmatpush.msra.mxu0 0.0
        %834 = vmatpush.msra.mxu0 %v818
        %835 = vmatpush.msra.mxu0 %v816
        %836 = vmatpush.msra.mxu0 %v814
        %837 = vmatpush.msra.mxu0 %v812
        %838 = vmatpush.msra.mxu0 %v810
        %839 = vmatpush.msra.mxu0 %v808
        %840 = vmatpush.msra.mxu0 %v806
        %841 = vmatpush.msra.mxu0 %v804
        %842 = vmatmul.f32.gmra.mxu0 %v821
        %v843 = vpop.f32.mrf.mxu0
        %v844 = vadd.f32 0.0, %v843
        %845 = vmatmul.f32.gmra.mxu0 %v824
        %v846 = vpop.f32.mrf.mxu0
        %v847 = vadd.f32 0.0, %v846
        %848 = vdwg.mxu0
        %849 = vmatpush.msra.mxu0 0.0
        %850 = vmatpush.msra.mxu0 0.0
        %851 = vmatpush.msra.mxu0 0.0
        %852 = vmatpush.msra.mxu0 0.0
        %853 = vmatpush.msra.mxu0 0.0
        %854 = vmatpush.msra.mxu0 0.0
        %855 = vmatpush.msra.mxu0 0.0
        %856 = vmatpush.msra.mxu0 0.0
        %857 = vmatpush.msra.mxu0 %v819
        %858 = vmatpush.msra.mxu0 %v817
        %859 = vmatpush.msra.mxu0 %v815
        %860 = vmatpush.msra.mxu0 %v813
        %861 = vmatpush.msra.mxu0 %v811
        %862 = vmatpush.msra.mxu0 %v809
        %863 = vmatpush.msra.mxu0 %v807
        %864 = vmatpush.msra.mxu0 %v805
        %865 = vmatmul.f32.gmra.mxu0 %v821
        %v866 = vpop.f32.mrf.mxu0
        %v867 = vadd.f32 0.0, %v866
        %868 = vmatmul.f32.gmra.mxu0 %v824
        %v869 = vpop.f32.mrf.mxu0
        %v870 = vadd.f32 0.0, %v869
        %871 = vdwg.mxu0
        %v873 = vsel %vm462, %v784, 0
        %v876 = vsel %vm462, %v785, 0
        %878 = vmatpush.msra.mxu0 0.0
        %879 = vmatpush.msra.mxu0 0.0
        %880 = vmatpush.msra.mxu0 0.0
        %881 = vmatpush.msra.mxu0 0.0
        %882 = vmatpush.msra.mxu0 0.0
        %883 = vmatpush.msra.mxu0 0.0
        %884 = vmatpush.msra.mxu0 0.0
        %885 = vmatpush.msra.mxu0 0.0
        %886 = vmatpush.msra.mxu0 %v800
        %887 = vmatpush.msra.mxu0 %v798
        %888 = vmatpush.msra.mxu0 %v796
        %889 = vmatpush.msra.mxu0 %v794
        %890 = vmatpush.msra.mxu0 %v792
        %891 = vmatpush.msra.mxu0 %v790
        %892 = vmatpush.msra.mxu0 %v788
        %893 = vmatpush.msra.mxu0 %v786
        %894 = vmatmul.f32.gmra.mxu0 %v873
        %v895 = vpop.f32.mrf.mxu0
        %v896 = vadd.f32 %v844, %v895
        %897 = vmatmul.f32.gmra.mxu0 %v876
        %v898 = vpop.f32.mrf.mxu0
        %v899 = vadd.f32 %v847, %v898
        %900 = vdwg.mxu0
        %901 = vmatpush.msra.mxu0 0.0
        %902 = vmatpush.msra.mxu0 0.0
        %903 = vmatpush.msra.mxu0 0.0
        %904 = vmatpush.msra.mxu0 0.0
        %905 = vmatpush.msra.mxu0 0.0
        %906 = vmatpush.msra.mxu0 0.0
        %907 = vmatpush.msra.mxu0 0.0
        %908 = vmatpush.msra.mxu0 0.0
        %909 = vmatpush.msra.mxu0 %v801
        %910 = vmatpush.msra.mxu0 %v799
        %911 = vmatpush.msra.mxu0 %v797
        %912 = vmatpush.msra.mxu0 %v795
        %913 = vmatpush.msra.mxu0 %v793
        %914 = vmatpush.msra.mxu0 %v791
        %915 = vmatpush.msra.mxu0 %v789
        %916 = vmatpush.msra.mxu0 %v787
        %917 = vmatmul.f32.gmra.mxu0 %v873
        %v918 = vpop.f32.mrf.mxu0
        %v919 = vadd.f32 %v867, %v918
        %920 = vmatmul.f32.gmra.mxu0 %v876
        %v921 = vpop.f32.mrf.mxu0
        %v922 = vadd.f32 %v870, %v921
        %923 = vdwg.mxu0
        %v924 = vld [vmem:[%s436 + $0x1] sm:$0xff]
        %v925 = vld [vmem:[%s436 + $0x9] sm:$0xff]
        %v926 = vld [vmem:[%s675] sm:$0xff]
        %v927 = vld [vmem:[%s675 + $0x8] sm:$0xff]
        %v928 = vld [vmem:[%s675 + $0x10] sm:$0xff]
        %v929 = vld [vmem:[%s675 + $0x18] sm:$0xff]
        %v930 = vld [vmem:[%s675 + $0x20] sm:$0xff]
        %v931 = vld [vmem:[%s675 + $0x28] sm:$0xff]
        %v932 = vld [vmem:[%s675 + $0x30] sm:$0xff]
        %v933 = vld [vmem:[%s675 + $0x38] sm:$0xff]
        %v934 = vld [vmem:[%s675 + $0x40] sm:$0xff]
        %v935 = vld [vmem:[%s675 + $0x48] sm:$0xff]
        %v936 = vld [vmem:[%s675 + $0x50] sm:$0xff]
        %v937 = vld [vmem:[%s675 + $0x58] sm:$0xff]
        %v938 = vld [vmem:[%s675 + $0x60] sm:$0xff]
        %v939 = vld [vmem:[%s675 + $0x68] sm:$0xff]
        %v940 = vld [vmem:[%s675 + $0x70] sm:$0xff]
        %v941 = vld [vmem:[%s675 + $0x78] sm:$0xff]
        %v943 = vsel %vm462, %v924, 0
        %v946 = vsel %vm462, %v925, 0
        %948 = vmatpush.msra.mxu0 0.0
        %949 = vmatpush.msra.mxu0 0.0
        %950 = vmatpush.msra.mxu0 0.0
        %951 = vmatpush.msra.mxu0 0.0
        %952 = vmatpush.msra.mxu0 0.0
        %953 = vmatpush.msra.mxu0 0.0
        %954 = vmatpush.msra.mxu0 0.0
        %955 = vmatpush.msra.mxu0 0.0
        %956 = vmatpush.msra.mxu0 %v940
        %957 = vmatpush.msra.mxu0 %v938
        %958 = vmatpush.msra.mxu0 %v936
        %959 = vmatpush.msra.mxu0 %v934
        %960 = vmatpush.msra.mxu0 %v932
        %961 = vmatpush.msra.mxu0 %v930
        %962 = vmatpush.msra.mxu0 %v928
        %963 = vmatpush.msra.mxu0 %v926
        %964 = vmatmul.f32.gmra.mxu0 %v943
        %v965 = vpop.f32.mrf.mxu0
        %v966 = vadd.f32 0.0, %v965
        %967 = vmatmul.f32.gmra.mxu0 %v946
        %v968 = vpop.f32.mrf.mxu0
        %v969 = vadd.f32 0.0, %v968
        %970 = vdwg.mxu0
        %971 = vmatpush.msra.mxu0 0.0
        %972 = vmatpush.msra.mxu0 0.0
        %973 = vmatpush.msra.mxu0 0.0
        %974 = vmatpush.msra.mxu0 0.0
        %975 = vmatpush.msra.mxu0 0.0
        %976 = vmatpush.msra.mxu0 0.0
        %977 = vmatpush.msra.mxu0 0.0
        %978 = vmatpush.msra.mxu0 0.0
        %979 = vmatpush.msra.mxu0 %v941
        %980 = vmatpush.msra.mxu0 %v939
        %981 = vmatpush.msra.mxu0 %v937
        %982 = vmatpush.msra.mxu0 %v935
        %983 = vmatpush.msra.mxu0 %v933
        %984 = vmatpush.msra.mxu0 %v931
        %985 = vmatpush.msra.mxu0 %v929
        %986 = vmatpush.msra.mxu0 %v927
        %987 = vmatmul.f32.gmra.mxu0 %v943
        %v988 = vpop.f32.mrf.mxu0
        %v989 = vadd.f32 0.0, %v988
        %990 = vmatmul.f32.gmra.mxu0 %v946
        %v991 = vpop.f32.mrf.mxu0
        %v992 = vadd.f32 0.0, %v991
        %993 = vdwg.mxu0
        %v994 = vadd.f32 %v896, %v966
        %v995 = vadd.f32 %v919, %v989
        %v996 = vadd.f32 %v899, %v969
        %v997 = vadd.f32 %v922, %v992
        %v998 = vld [vmem:[%s4] sm:$0x3]
        %v1000 = vperm.slane %v998, 0
        %v1001 = vperm.slane %v998, 1
        %v1004 = vmul.f32 %v994, %v1000
        %v1005 = vmul.f32 %v995, %v1001
        %v1006 = vmul.f32 %v996, %v1000
        %v1007 = vmul.f32 %v997, %v1001
        %v1008 = vld [vmem:[%s5] sm:$0x3]
        %v1010 = vperm.slane %v1008, 0
        %v1011 = vperm.slane %v1008, 1
        %v1014 = vadd.f32 %v1004, %v1010
        %v1015 = vadd.f32 %v1005, %v1011
        %v1016 = vadd.f32 %v1006, %v1010
        %v1017 = vadd.f32 %v1007, %v1011
        %vm1018 = vcmp.gt.f32.partialorder %v1014, 0.0
        %vm1019 = vcmp.gt.f32.partialorder %v1015, 0.0
        %vm1020 = vcmp.gt.f32.partialorder %v1016, 0.0
        %vm1021 = vcmp.gt.f32.partialorder %v1017, 0.0
        %v1022 = vmul.f32 %v1014, 0.01
        %v1023 = vmul.f32 %v1015, 0.01
        %v1024 = vmul.f32 %v1016, 0.01
        %v1025 = vmul.f32 %v1017, 0.01
        %v1026 = vsel %vm1018, %v1014, %v1022
        %v1027 = vsel %vm1019, %v1015, %v1023
        %v1028 = vsel %vm1020, %v1016, %v1024
        %v1029 = vsel %vm1021, %v1017, %v1025
        %vm1034 = vcmask 1040384
        %v1035 = vrot.slane %v1026, 7
        %v1036 = vrot.slane %v1027, 7
        %v1037 = vrot.slane %v1028, 7
        %v1038 = vsel %vm1034, %v1035, %v1037
        %v1039 = vrot.slane %v1029, 7
        %v1040 = vsel %vm1034, %v1036, %v1039
        %1047 = vst [vmem:[#allocation3] sm:$0xfe] %v1035
        %1048 = vst [vmem:[#allocation3 + $0x8] sm:$0xfe] %v1036
        %1049 = vst [vmem:[#allocation3 + $0x10] sm:$0xff] %v1038
        %1050 = vst [vmem:[#allocation3 + $0x18] sm:$0xff] %v1040
        %1051 = vst [vmem:[#allocation3 + $0x20] sm:$0x1] %v1037
        %1052 = vst [vmem:[#allocation3 + $0x28] sm:$0x1] %v1039
        %v1053 = vld [vmem:[#allocation3] sm:$0xff]
        %v1054 = vld [vmem:[#allocation3 + $0x8] sm:$0xff]
        %v1055 = vld [vmem:[#allocation3 + $0x10] sm:$0xff]
        %v1056 = vld [vmem:[#allocation3 + $0x18] sm:$0xff]
        %v1057 = vld [vmem:[#allocation12] sm:$0xff]
        %v1058 = vld [vmem:[#allocation12 + $0x8] sm:$0xff]
        %v1059 = vld [vmem:[#allocation12 + $0x10] sm:$0xff]
        %v1060 = vld [vmem:[#allocation12 + $0x18] sm:$0xff]
        %v1061 = vld [vmem:[#allocation12 + $0x20] sm:$0xff]
        %v1062 = vld [vmem:[#allocation12 + $0x28] sm:$0xff]
        %v1063 = vld [vmem:[#allocation12 + $0x30] sm:$0xff]
        %v1064 = vld [vmem:[#allocation12 + $0x38] sm:$0xff]
        %v1065 = vld [vmem:[#allocation12 + $0x40] sm:$0xff]
        %v1066 = vld [vmem:[#allocation12 + $0x48] sm:$0xff]
        %v1067 = vld [vmem:[#allocation12 + $0x50] sm:$0xff]
        %v1068 = vld [vmem:[#allocation12 + $0x58] sm:$0xff]
        %v1069 = vld [vmem:[#allocation12 + $0x60] sm:$0xff]
        %v1070 = vld [vmem:[#allocation12 + $0x68] sm:$0xff]
        %v1071 = vld [vmem:[#allocation12 + $0x70] sm:$0xff]
        %v1072 = vld [vmem:[#allocation12 + $0x78] sm:$0xff]
        %v1073 = vld [vmem:[#allocation12 + $0x80] sm:$0xff]
        %v1074 = vld [vmem:[#allocation12 + $0x88] sm:$0xff]
        %v1075 = vld [vmem:[#allocation12 + $0x90] sm:$0xff]
        %v1076 = vld [vmem:[#allocation12 + $0x98] sm:$0xff]
        %v1077 = vld [vmem:[#allocation12 + $0xa0] sm:$0xff]
        %v1078 = vld [vmem:[#allocation12 + $0xa8] sm:$0xff]
        %v1079 = vld [vmem:[#allocation12 + $0xb0] sm:$0xff]
        %v1080 = vld [vmem:[#allocation12 + $0xb8] sm:$0xff]
        %v1081 = vld [vmem:[#allocation12 + $0xc0] sm:$0xff]
        %v1082 = vld [vmem:[#allocation12 + $0xc8] sm:$0xff]
        %v1083 = vld [vmem:[#allocation12 + $0xd0] sm:$0xff]
        %v1084 = vld [vmem:[#allocation12 + $0xd8] sm:$0xff]
        %v1085 = vld [vmem:[#allocation12 + $0xe0] sm:$0xff]
        %v1086 = vld [vmem:[#allocation12 + $0xe8] sm:$0xff]
        %v1087 = vld [vmem:[#allocation12 + $0xf0] sm:$0xff]
        %v1088 = vld [vmem:[#allocation12 + $0xf8] sm:$0xff]
        %v1089 = vld [vmem:[#allocation12 + $0x100] sm:$0xff]
        %v1090 = vld [vmem:[#allocation12 + $0x108] sm:$0xff]
        %v1091 = vld [vmem:[#allocation12 + $0x110] sm:$0xff]
        %v1092 = vld [vmem:[#allocation12 + $0x118] sm:$0xff]
        %v1093 = vld [vmem:[#allocation12 + $0x120] sm:$0xff]
        %v1094 = vld [vmem:[#allocation12 + $0x128] sm:$0xff]
        %v1095 = vld [vmem:[#allocation12 + $0x130] sm:$0xff]
        %v1096 = vld [vmem:[#allocation12 + $0x138] sm:$0xff]
        %v1097 = vld [vmem:[#allocation12 + $0x140] sm:$0xff]
        %v1098 = vld [vmem:[#allocation12 + $0x148] sm:$0xff]
        %v1099 = vld [vmem:[#allocation12 + $0x150] sm:$0xff]
        %v1100 = vld [vmem:[#allocation12 + $0x158] sm:$0xff]
        %v1101 = vld [vmem:[#allocation12 + $0x160] sm:$0xff]
        %v1102 = vld [vmem:[#allocation12 + $0x168] sm:$0xff]
        %v1103 = vld [vmem:[#allocation12 + $0x170] sm:$0xff]
        %v1104 = vld [vmem:[#allocation12 + $0x178] sm:$0xff]
        %v1105 = vld [vmem:[#allocation12 + $0x180] sm:$0xff]
        %v1106 = vld [vmem:[#allocation12 + $0x188] sm:$0xff]
        %v1107 = vld [vmem:[#allocation12 + $0x190] sm:$0xff]
        %v1108 = vld [vmem:[#allocation12 + $0x198] sm:$0xff]
        %v1109 = vld [vmem:[#allocation12 + $0x1a0] sm:$0xff]
        %v1110 = vld [vmem:[#allocation12 + $0x1a8] sm:$0xff]
        %v1111 = vld [vmem:[#allocation12 + $0x1b0] sm:$0xff]
        %v1112 = vld [vmem:[#allocation12 + $0x1b8] sm:$0xff]
        %v1113 = vld [vmem:[#allocation12 + $0x1c0] sm:$0xff]
        %v1114 = vld [vmem:[#allocation12 + $0x1c8] sm:$0xff]
        %v1115 = vld [vmem:[#allocation12 + $0x1d0] sm:$0xff]
        %v1116 = vld [vmem:[#allocation12 + $0x1d8] sm:$0xff]
        %v1117 = vld [vmem:[#allocation12 + $0x1e0] sm:$0xff]
        %v1118 = vld [vmem:[#allocation12 + $0x1e8] sm:$0xff]
        %v1119 = vld [vmem:[#allocation12 + $0x1f0] sm:$0xff]
        %v1120 = vld [vmem:[#allocation12 + $0x1f8] sm:$0xff]
        %v1121 = vld [vmem:[%s444] sm:$0xff]
        %v1122 = vld [vmem:[%s444 + $0x8] sm:$0xff]
        %v1123 = vld [vmem:[%s444 + $0x10] sm:$0xff]
        %v1124 = vld [vmem:[%s444 + $0x18] sm:$0xff]
        %s1125 = scalar_lea.vmem [#allocation12], 512
        %v1126 = vld [vmem:[%s1125] sm:$0xff]
        %v1127 = vld [vmem:[%s1125 + $0x8] sm:$0xff]
        %v1128 = vld [vmem:[%s1125 + $0x10] sm:$0xff]
        %v1129 = vld [vmem:[%s1125 + $0x18] sm:$0xff]
        %v1130 = vld [vmem:[%s1125 + $0x20] sm:$0xff]
        %v1131 = vld [vmem:[%s1125 + $0x28] sm:$0xff]
        %v1132 = vld [vmem:[%s1125 + $0x30] sm:$0xff]
        %v1133 = vld [vmem:[%s1125 + $0x38] sm:$0xff]
        %v1134 = vld [vmem:[%s1125 + $0x40] sm:$0xff]
        %v1135 = vld [vmem:[%s1125 + $0x48] sm:$0xff]
        %v1136 = vld [vmem:[%s1125 + $0x50] sm:$0xff]
        %v1137 = vld [vmem:[%s1125 + $0x58] sm:$0xff]
        %v1138 = vld [vmem:[%s1125 + $0x60] sm:$0xff]
        %v1139 = vld [vmem:[%s1125 + $0x68] sm:$0xff]
        %v1140 = vld [vmem:[%s1125 + $0x70] sm:$0xff]
        %v1141 = vld [vmem:[%s1125 + $0x78] sm:$0xff]
        %v1142 = vld [vmem:[%s1125 + $0x80] sm:$0xff]
        %v1143 = vld [vmem:[%s1125 + $0x88] sm:$0xff]
        %v1144 = vld [vmem:[%s1125 + $0x90] sm:$0xff]
        %v1145 = vld [vmem:[%s1125 + $0x98] sm:$0xff]
        %v1146 = vld [vmem:[%s1125 + $0xa0] sm:$0xff]
        %v1147 = vld [vmem:[%s1125 + $0xa8] sm:$0xff]
        %v1148 = vld [vmem:[%s1125 + $0xb0] sm:$0xff]
        %v1149 = vld [vmem:[%s1125 + $0xb8] sm:$0xff]
        %v1150 = vld [vmem:[%s1125 + $0xc0] sm:$0xff]
        %v1151 = vld [vmem:[%s1125 + $0xc8] sm:$0xff]
        %v1152 = vld [vmem:[%s1125 + $0xd0] sm:$0xff]
        %v1153 = vld [vmem:[%s1125 + $0xd8] sm:$0xff]
        %v1154 = vld [vmem:[%s1125 + $0xe0] sm:$0xff]
        %v1155 = vld [vmem:[%s1125 + $0xe8] sm:$0xff]
        %v1156 = vld [vmem:[%s1125 + $0xf0] sm:$0xff]
        %v1157 = vld [vmem:[%s1125 + $0xf8] sm:$0xff]
        %v1158 = vld [vmem:[%s1125 + $0x100] sm:$0xff]
        %v1159 = vld [vmem:[%s1125 + $0x108] sm:$0xff]
        %v1160 = vld [vmem:[%s1125 + $0x110] sm:$0xff]
        %v1161 = vld [vmem:[%s1125 + $0x118] sm:$0xff]
        %v1162 = vld [vmem:[%s1125 + $0x120] sm:$0xff]
        %v1163 = vld [vmem:[%s1125 + $0x128] sm:$0xff]
        %v1164 = vld [vmem:[%s1125 + $0x130] sm:$0xff]
        %v1165 = vld [vmem:[%s1125 + $0x138] sm:$0xff]
        %v1166 = vld [vmem:[%s1125 + $0x140] sm:$0xff]
        %v1167 = vld [vmem:[%s1125 + $0x148] sm:$0xff]
        %v1168 = vld [vmem:[%s1125 + $0x150] sm:$0xff]
        %v1169 = vld [vmem:[%s1125 + $0x158] sm:$0xff]
        %v1170 = vld [vmem:[%s1125 + $0x160] sm:$0xff]
        %v1171 = vld [vmem:[%s1125 + $0x168] sm:$0xff]
        %v1172 = vld [vmem:[%s1125 + $0x170] sm:$0xff]
        %v1173 = vld [vmem:[%s1125 + $0x178] sm:$0xff]
        %v1174 = vld [vmem:[%s1125 + $0x180] sm:$0xff]
        %v1175 = vld [vmem:[%s1125 + $0x188] sm:$0xff]
        %v1176 = vld [vmem:[%s1125 + $0x190] sm:$0xff]
        %v1177 = vld [vmem:[%s1125 + $0x198] sm:$0xff]
        %v1178 = vld [vmem:[%s1125 + $0x1a0] sm:$0xff]
        %v1179 = vld [vmem:[%s1125 + $0x1a8] sm:$0xff]
        %v1180 = vld [vmem:[%s1125 + $0x1b0] sm:$0xff]
        %v1181 = vld [vmem:[%s1125 + $0x1b8] sm:$0xff]
        %v1182 = vld [vmem:[%s1125 + $0x1c0] sm:$0xff]
        %v1183 = vld [vmem:[%s1125 + $0x1c8] sm:$0xff]
        %v1184 = vld [vmem:[%s1125 + $0x1d0] sm:$0xff]
        %v1185 = vld [vmem:[%s1125 + $0x1d8] sm:$0xff]
        %v1186 = vld [vmem:[%s1125 + $0x1e0] sm:$0xff]
        %v1187 = vld [vmem:[%s1125 + $0x1e8] sm:$0xff]
        %v1188 = vld [vmem:[%s1125 + $0x1f0] sm:$0xff]
        %v1189 = vld [vmem:[%s1125 + $0x1f8] sm:$0xff]
        %1190 = vmatpush.msra.mxu0 %v1156
        %1191 = vmatpush.msra.mxu0 %v1154
        %1192 = vmatpush.msra.mxu0 %v1152
        %1193 = vmatpush.msra.mxu0 %v1150
        %1194 = vmatpush.msra.mxu0 %v1148
        %1195 = vmatpush.msra.mxu0 %v1146
        %1196 = vmatpush.msra.mxu0 %v1144
        %1197 = vmatpush.msra.mxu0 %v1142
        %1198 = vmatpush.msra.mxu0 %v1140
        %1199 = vmatpush.msra.mxu0 %v1138
        %1200 = vmatpush.msra.mxu0 %v1136
        %1201 = vmatpush.msra.mxu0 %v1134
        %1202 = vmatpush.msra.mxu0 %v1132
        %1203 = vmatpush.msra.mxu0 %v1130
        %1204 = vmatpush.msra.mxu0 %v1128
        %1205 = vmatpush.msra.mxu0 %v1126
        %1206 = vmatmul.f32.gmra.mxu0 %v1121
        %v1207 = vpop.f32.mrf.mxu0
        %v1208 = vadd.f32 0.0, %v1207
        %1209 = vmatmul.f32.gmra.mxu0 %v1123
        %v1210 = vpop.f32.mrf.mxu0
        %v1211 = vadd.f32 0.0, %v1210
        %1212 = vdwg.mxu0
        %1213 = vmatpush.msra.mxu0 %v1188
        %1214 = vmatpush.msra.mxu0 %v1186
        %1215 = vmatpush.msra.mxu0 %v1184
        %1216 = vmatpush.msra.mxu0 %v1182
        %1217 = vmatpush.msra.mxu0 %v1180
        %1218 = vmatpush.msra.mxu0 %v1178
        %1219 = vmatpush.msra.mxu0 %v1176
        %1220 = vmatpush.msra.mxu0 %v1174
        %1221 = vmatpush.msra.mxu0 %v1172
        %1222 = vmatpush.msra.mxu0 %v1170
        %1223 = vmatpush.msra.mxu0 %v1168
        %1224 = vmatpush.msra.mxu0 %v1166
        %1225 = vmatpush.msra.mxu0 %v1164
        %1226 = vmatpush.msra.mxu0 %v1162
        %1227 = vmatpush.msra.mxu0 %v1160
        %1228 = vmatpush.msra.mxu0 %v1158
        %1229 = vmatmul.f32.gmra.mxu0 %v1122
        %v1230 = vpop.f32.mrf.mxu0
        %v1231 = vadd.f32 %v1208, %v1230
        %1232 = vmatmul.f32.gmra.mxu0 %v1124
        %v1233 = vpop.f32.mrf.mxu0
        %v1234 = vadd.f32 %v1211, %v1233
        %1235 = vdwg.mxu0
        %1236 = vmatpush.msra.mxu0 %v1157
        %1237 = vmatpush.msra.mxu0 %v1155
        %1238 = vmatpush.msra.mxu0 %v1153
        %1239 = vmatpush.msra.mxu0 %v1151
        %1240 = vmatpush.msra.mxu0 %v1149
        %1241 = vmatpush.msra.mxu0 %v1147
        %1242 = vmatpush.msra.mxu0 %v1145
        %1243 = vmatpush.msra.mxu0 %v1143
        %1244 = vmatpush.msra.mxu0 %v1141
        %1245 = vmatpush.msra.mxu0 %v1139
        %1246 = vmatpush.msra.mxu0 %v1137
        %1247 = vmatpush.msra.mxu0 %v1135
        %1248 = vmatpush.msra.mxu0 %v1133
        %1249 = vmatpush.msra.mxu0 %v1131
        %1250 = vmatpush.msra.mxu0 %v1129
        %1251 = vmatpush.msra.mxu0 %v1127
        %1252 = vmatmul.f32.gmra.mxu0 %v1121
        %v1253 = vpop.f32.mrf.mxu0
        %v1254 = vadd.f32 0.0, %v1253
        %1255 = vmatmul.f32.gmra.mxu0 %v1123
        %v1256 = vpop.f32.mrf.mxu0
        %v1257 = vadd.f32 0.0, %v1256
        %1258 = vdwg.mxu0
        %1259 = vmatpush.msra.mxu0 %v1189
        %1260 = vmatpush.msra.mxu0 %v1187
        %1261 = vmatpush.msra.mxu0 %v1185
        %1262 = vmatpush.msra.mxu0 %v1183
        %1263 = vmatpush.msra.mxu0 %v1181
        %1264 = vmatpush.msra.mxu0 %v1179
        %1265 = vmatpush.msra.mxu0 %v1177
        %1266 = vmatpush.msra.mxu0 %v1175
        %1267 = vmatpush.msra.mxu0 %v1173
        %1268 = vmatpush.msra.mxu0 %v1171
        %1269 = vmatpush.msra.mxu0 %v1169
        %1270 = vmatpush.msra.mxu0 %v1167
        %1271 = vmatpush.msra.mxu0 %v1165
        %1272 = vmatpush.msra.mxu0 %v1163
        %1273 = vmatpush.msra.mxu0 %v1161
        %1274 = vmatpush.msra.mxu0 %v1159
        %1275 = vmatmul.f32.gmra.mxu0 %v1122
        %v1276 = vpop.f32.mrf.mxu0
        %v1277 = vadd.f32 %v1254, %v1276
        %1278 = vmatmul.f32.gmra.mxu0 %v1124
        %v1279 = vpop.f32.mrf.mxu0
        %v1280 = vadd.f32 %v1257, %v1279
        %1281 = vdwg.mxu0
        %1282 = vmatpush.msra.mxu0 %v1087
        %1283 = vmatpush.msra.mxu0 %v1085
        %1284 = vmatpush.msra.mxu0 %v1083
        %1285 = vmatpush.msra.mxu0 %v1081
        %1286 = vmatpush.msra.mxu0 %v1079
        %1287 = vmatpush.msra.mxu0 %v1077
        %1288 = vmatpush.msra.mxu0 %v1075
        %1289 = vmatpush.msra.mxu0 %v1073
        %1290 = vmatpush.msra.mxu0 %v1071
        %1291 = vmatpush.msra.mxu0 %v1069
        %1292 = vmatpush.msra.mxu0 %v1067
        %1293 = vmatpush.msra.mxu0 %v1065
        %1294 = vmatpush.msra.mxu0 %v1063
        %1295 = vmatpush.msra.mxu0 %v1061
        %1296 = vmatpush.msra.mxu0 %v1059
        %1297 = vmatpush.msra.mxu0 %v1057
        %1298 = vmatmul.f32.gmra.mxu0 %v1053
        %v1299 = vpop.f32.mrf.mxu0
        %v1300 = vadd.f32 %v1231, %v1299
        %1301 = vmatmul.f32.gmra.mxu0 %v1055
        %v1302 = vpop.f32.mrf.mxu0
        %v1303 = vadd.f32 %v1234, %v1302
        %1304 = vdwg.mxu0
        %1305 = vmatpush.msra.mxu0 %v1119
        %1306 = vmatpush.msra.mxu0 %v1117
        %1307 = vmatpush.msra.mxu0 %v1115
        %1308 = vmatpush.msra.mxu0 %v1113
        %1309 = vmatpush.msra.mxu0 %v1111
        %1310 = vmatpush.msra.mxu0 %v1109
        %1311 = vmatpush.msra.mxu0 %v1107
        %1312 = vmatpush.msra.mxu0 %v1105
        %1313 = vmatpush.msra.mxu0 %v1103
        %1314 = vmatpush.msra.mxu0 %v1101
        %1315 = vmatpush.msra.mxu0 %v1099
        %1316 = vmatpush.msra.mxu0 %v1097
        %1317 = vmatpush.msra.mxu0 %v1095
        %1318 = vmatpush.msra.mxu0 %v1093
        %1319 = vmatpush.msra.mxu0 %v1091
        %1320 = vmatpush.msra.mxu0 %v1089
        %1321 = vmatmul.f32.gmra.mxu0 %v1054
        %v1322 = vpop.f32.mrf.mxu0
        %v1323 = vadd.f32 %v1300, %v1322
        %1324 = vmatmul.f32.gmra.mxu0 %v1056
        %v1325 = vpop.f32.mrf.mxu0
        %v1326 = vadd.f32 %v1303, %v1325
        %1327 = vdwg.mxu0
        %1328 = vmatpush.msra.mxu0 %v1088
        %1329 = vmatpush.msra.mxu0 %v1086
        %1330 = vmatpush.msra.mxu0 %v1084
        %1331 = vmatpush.msra.mxu0 %v1082
        %1332 = vmatpush.msra.mxu0 %v1080
        %1333 = vmatpush.msra.mxu0 %v1078
        %1334 = vmatpush.msra.mxu0 %v1076
        %1335 = vmatpush.msra.mxu0 %v1074
        %1336 = vmatpush.msra.mxu0 %v1072
        %1337 = vmatpush.msra.mxu0 %v1070
        %1338 = vmatpush.msra.mxu0 %v1068
        %1339 = vmatpush.msra.mxu0 %v1066
        %1340 = vmatpush.msra.mxu0 %v1064
        %1341 = vmatpush.msra.mxu0 %v1062
        %1342 = vmatpush.msra.mxu0 %v1060
        %1343 = vmatpush.msra.mxu0 %v1058
        %1344 = vmatmul.f32.gmra.mxu0 %v1053
        %v1345 = vpop.f32.mrf.mxu0
        %v1346 = vadd.f32 %v1277, %v1345
        %1347 = vmatmul.f32.gmra.mxu0 %v1055
        %v1348 = vpop.f32.mrf.mxu0
        %v1349 = vadd.f32 %v1280, %v1348
        %1350 = vdwg.mxu0
        %1351 = vmatpush.msra.mxu0 %v1120
        %1352 = vmatpush.msra.mxu0 %v1118
        %1353 = vmatpush.msra.mxu0 %v1116
        %1354 = vmatpush.msra.mxu0 %v1114
        %1355 = vmatpush.msra.mxu0 %v1112
        %1356 = vmatpush.msra.mxu0 %v1110
        %1357 = vmatpush.msra.mxu0 %v1108
        %1358 = vmatpush.msra.mxu0 %v1106
        %1359 = vmatpush.msra.mxu0 %v1104
        %1360 = vmatpush.msra.mxu0 %v1102
        %1361 = vmatpush.msra.mxu0 %v1100
        %1362 = vmatpush.msra.mxu0 %v1098
        %1363 = vmatpush.msra.mxu0 %v1096
        %1364 = vmatpush.msra.mxu0 %v1094
        %1365 = vmatpush.msra.mxu0 %v1092
        %1366 = vmatpush.msra.mxu0 %v1090
        %1367 = vmatmul.f32.gmra.mxu0 %v1054
        %v1368 = vpop.f32.mrf.mxu0
        %v1369 = vadd.f32 %v1346, %v1368
        %1370 = vmatmul.f32.gmra.mxu0 %v1056
        %v1371 = vpop.f32.mrf.mxu0
        %v1372 = vadd.f32 %v1349, %v1371
        %1373 = vdwg.mxu0
        %v1374 = vld [vmem:[#allocation3] sm:$0xfe]
        %v1375 = vld [vmem:[#allocation3 + $0x8] sm:$0xfe]
        %v1376 = vld [vmem:[#allocation3 + $0x10] sm:$0xff]
        %v1377 = vld [vmem:[#allocation3 + $0x18] sm:$0xff]
        %v1378 = vld [vmem:[#allocation3 + $0x20] sm:$0x1]
        %v1379 = vld [vmem:[#allocation3 + $0x28] sm:$0x1]
        %s1380 = scalar_lea.vmem [#allocation12], 1024
        %v1381 = vld [vmem:[%s1380] sm:$0xff]
        %v1382 = vld [vmem:[%s1380 + $0x8] sm:$0xff]
        %v1383 = vld [vmem:[%s1380 + $0x10] sm:$0xff]
        %v1384 = vld [vmem:[%s1380 + $0x18] sm:$0xff]
        %v1385 = vld [vmem:[%s1380 + $0x20] sm:$0xff]
        %v1386 = vld [vmem:[%s1380 + $0x28] sm:$0xff]
        %v1387 = vld [vmem:[%s1380 + $0x30] sm:$0xff]
        %v1388 = vld [vmem:[%s1380 + $0x38] sm:$0xff]
        %v1389 = vld [vmem:[%s1380 + $0x40] sm:$0xff]
        %v1390 = vld [vmem:[%s1380 + $0x48] sm:$0xff]
        %v1391 = vld [vmem:[%s1380 + $0x50] sm:$0xff]
        %v1392 = vld [vmem:[%s1380 + $0x58] sm:$0xff]
        %v1393 = vld [vmem:[%s1380 + $0x60] sm:$0xff]
        %v1394 = vld [vmem:[%s1380 + $0x68] sm:$0xff]
        %v1395 = vld [vmem:[%s1380 + $0x70] sm:$0xff]
        %v1396 = vld [vmem:[%s1380 + $0x78] sm:$0xff]
        %v1397 = vld [vmem:[%s1380 + $0x80] sm:$0xff]
        %v1398 = vld [vmem:[%s1380 + $0x88] sm:$0xff]
        %v1399 = vld [vmem:[%s1380 + $0x90] sm:$0xff]
        %v1400 = vld [vmem:[%s1380 + $0x98] sm:$0xff]
        %v1401 = vld [vmem:[%s1380 + $0xa0] sm:$0xff]
        %v1402 = vld [vmem:[%s1380 + $0xa8] sm:$0xff]
        %v1403 = vld [vmem:[%s1380 + $0xb0] sm:$0xff]
        %v1404 = vld [vmem:[%s1380 + $0xb8] sm:$0xff]
        %v1405 = vld [vmem:[%s1380 + $0xc0] sm:$0xff]
        %v1406 = vld [vmem:[%s1380 + $0xc8] sm:$0xff]
        %v1407 = vld [vmem:[%s1380 + $0xd0] sm:$0xff]
        %v1408 = vld [vmem:[%s1380 + $0xd8] sm:$0xff]
        %v1409 = vld [vmem:[%s1380 + $0xe0] sm:$0xff]
        %v1410 = vld [vmem:[%s1380 + $0xe8] sm:$0xff]
        %v1411 = vld [vmem:[%s1380 + $0xf0] sm:$0xff]
        %v1412 = vld [vmem:[%s1380 + $0xf8] sm:$0xff]
        %v1413 = vld [vmem:[%s1380 + $0x100] sm:$0xff]
        %v1414 = vld [vmem:[%s1380 + $0x108] sm:$0xff]
        %v1415 = vld [vmem:[%s1380 + $0x110] sm:$0xff]
        %v1416 = vld [vmem:[%s1380 + $0x118] sm:$0xff]
        %v1417 = vld [vmem:[%s1380 + $0x120] sm:$0xff]
        %v1418 = vld [vmem:[%s1380 + $0x128] sm:$0xff]
        %v1419 = vld [vmem:[%s1380 + $0x130] sm:$0xff]
        %v1420 = vld [vmem:[%s1380 + $0x138] sm:$0xff]
        %v1421 = vld [vmem:[%s1380 + $0x140] sm:$0xff]
        %v1422 = vld [vmem:[%s1380 + $0x148] sm:$0xff]
        %v1423 = vld [vmem:[%s1380 + $0x150] sm:$0xff]
        %v1424 = vld [vmem:[%s1380 + $0x158] sm:$0xff]
        %v1425 = vld [vmem:[%s1380 + $0x160] sm:$0xff]
        %v1426 = vld [vmem:[%s1380 + $0x168] sm:$0xff]
        %v1427 = vld [vmem:[%s1380 + $0x170] sm:$0xff]
        %v1428 = vld [vmem:[%s1380 + $0x178] sm:$0xff]
        %v1429 = vld [vmem:[%s1380 + $0x180] sm:$0xff]
        %v1430 = vld [vmem:[%s1380 + $0x188] sm:$0xff]
        %v1431 = vld [vmem:[%s1380 + $0x190] sm:$0xff]
        %v1432 = vld [vmem:[%s1380 + $0x198] sm:$0xff]
        %v1433 = vld [vmem:[%s1380 + $0x1a0] sm:$0xff]
        %v1434 = vld [vmem:[%s1380 + $0x1a8] sm:$0xff]
        %v1435 = vld [vmem:[%s1380 + $0x1b0] sm:$0xff]
        %v1436 = vld [vmem:[%s1380 + $0x1b8] sm:$0xff]
        %v1437 = vld [vmem:[%s1380 + $0x1c0] sm:$0xff]
        %v1438 = vld [vmem:[%s1380 + $0x1c8] sm:$0xff]
        %v1439 = vld [vmem:[%s1380 + $0x1d0] sm:$0xff]
        %v1440 = vld [vmem:[%s1380 + $0x1d8] sm:$0xff]
        %v1441 = vld [vmem:[%s1380 + $0x1e0] sm:$0xff]
        %v1442 = vld [vmem:[%s1380 + $0x1e8] sm:$0xff]
        %v1443 = vld [vmem:[%s1380 + $0x1f0] sm:$0xff]
        %v1444 = vld [vmem:[%s1380 + $0x1f8] sm:$0xff]
        %vm1451 = vcmask 1046528
        %v1452 = vrot.slane %v1374, 1
        %v1453 = vrot.slane %v1376, 1
        %v1454 = vsel %vm1451, %v1452, %v1453
        %v1455 = vrot.slane %v1375, 1
        %v1456 = vrot.slane %v1377, 1
        %v1457 = vsel %vm1451, %v1455, %v1456
        %v1458 = vrot.slane %v1378, 1
        %v1459 = vsel %vm1451, %v1453, %v1458
        %v1460 = vrot.slane %v1379, 1
        %v1461 = vsel %vm1451, %v1456, %v1460
        %1466 = vmatpush.msra.mxu0 %v1411
        %1467 = vmatpush.msra.mxu0 %v1409
        %1468 = vmatpush.msra.mxu0 %v1407
        %1469 = vmatpush.msra.mxu0 %v1405
        %1470 = vmatpush.msra.mxu0 %v1403
        %1471 = vmatpush.msra.mxu0 %v1401
        %1472 = vmatpush.msra.mxu0 %v1399
        %1473 = vmatpush.msra.mxu0 %v1397
        %1474 = vmatpush.msra.mxu0 %v1395
        %1475 = vmatpush.msra.mxu0 %v1393
        %1476 = vmatpush.msra.mxu0 %v1391
        %1477 = vmatpush.msra.mxu0 %v1389
        %1478 = vmatpush.msra.mxu0 %v1387
        %1479 = vmatpush.msra.mxu0 %v1385
        %1480 = vmatpush.msra.mxu0 %v1383
        %1481 = vmatpush.msra.mxu0 %v1381
        %1482 = vmatmul.f32.gmra.mxu0 %v1454
        %v1483 = vpop.f32.mrf.mxu0
        %v1484 = vadd.f32 0.0, %v1483
        %1485 = vmatmul.f32.gmra.mxu0 %v1459
        %v1486 = vpop.f32.mrf.mxu0
        %v1487 = vadd.f32 0.0, %v1486
        %1488 = vdwg.mxu0
        %1489 = vmatpush.msra.mxu0 %v1443
        %1490 = vmatpush.msra.mxu0 %v1441
        %1491 = vmatpush.msra.mxu0 %v1439
        %1492 = vmatpush.msra.mxu0 %v1437
        %1493 = vmatpush.msra.mxu0 %v1435
        %1494 = vmatpush.msra.mxu0 %v1433
        %1495 = vmatpush.msra.mxu0 %v1431
        %1496 = vmatpush.msra.mxu0 %v1429
        %1497 = vmatpush.msra.mxu0 %v1427
        %1498 = vmatpush.msra.mxu0 %v1425
        %1499 = vmatpush.msra.mxu0 %v1423
        %1500 = vmatpush.msra.mxu0 %v1421
        %1501 = vmatpush.msra.mxu0 %v1419
        %1502 = vmatpush.msra.mxu0 %v1417
        %1503 = vmatpush.msra.mxu0 %v1415
        %1504 = vmatpush.msra.mxu0 %v1413
        %1505 = vmatmul.f32.gmra.mxu0 %v1457
        %v1506 = vpop.f32.mrf.mxu0
        %v1507 = vadd.f32 %v1484, %v1506
        %1508 = vmatmul.f32.gmra.mxu0 %v1461
        %v1509 = vpop.f32.mrf.mxu0
        %v1510 = vadd.f32 %v1487, %v1509
        %1511 = vdwg.mxu0
        %1512 = vmatpush.msra.mxu0 %v1412
        %1513 = vmatpush.msra.mxu0 %v1410
        %1514 = vmatpush.msra.mxu0 %v1408
        %1515 = vmatpush.msra.mxu0 %v1406
        %1516 = vmatpush.msra.mxu0 %v1404
        %1517 = vmatpush.msra.mxu0 %v1402
        %1518 = vmatpush.msra.mxu0 %v1400
        %1519 = vmatpush.msra.mxu0 %v1398
        %1520 = vmatpush.msra.mxu0 %v1396
        %1521 = vmatpush.msra.mxu0 %v1394
        %1522 = vmatpush.msra.mxu0 %v1392
        %1523 = vmatpush.msra.mxu0 %v1390
        %1524 = vmatpush.msra.mxu0 %v1388
        %1525 = vmatpush.msra.mxu0 %v1386
        %1526 = vmatpush.msra.mxu0 %v1384
        %1527 = vmatpush.msra.mxu0 %v1382
        %1528 = vmatmul.f32.gmra.mxu0 %v1454
        %v1529 = vpop.f32.mrf.mxu0
        %v1530 = vadd.f32 0.0, %v1529
        %1531 = vmatmul.f32.gmra.mxu0 %v1459
        %v1532 = vpop.f32.mrf.mxu0
        %v1533 = vadd.f32 0.0, %v1532
        %1534 = vdwg.mxu0
        %1535 = vmatpush.msra.mxu0 %v1444
        %1536 = vmatpush.msra.mxu0 %v1442
        %1537 = vmatpush.msra.mxu0 %v1440
        %1538 = vmatpush.msra.mxu0 %v1438
        %1539 = vmatpush.msra.mxu0 %v1436
        %1540 = vmatpush.msra.mxu0 %v1434
        %1541 = vmatpush.msra.mxu0 %v1432
        %1542 = vmatpush.msra.mxu0 %v1430
        %1543 = vmatpush.msra.mxu0 %v1428
        %1544 = vmatpush.msra.mxu0 %v1426
        %1545 = vmatpush.msra.mxu0 %v1424
        %1546 = vmatpush.msra.mxu0 %v1422
        %1547 = vmatpush.msra.mxu0 %v1420
        %1548 = vmatpush.msra.mxu0 %v1418
        %1549 = vmatpush.msra.mxu0 %v1416
        %1550 = vmatpush.msra.mxu0 %v1414
        %1551 = vmatmul.f32.gmra.mxu0 %v1457
        %v1552 = vpop.f32.mrf.mxu0
        %v1553 = vadd.f32 %v1530, %v1552
        %1554 = vmatmul.f32.gmra.mxu0 %v1461
        %v1555 = vpop.f32.mrf.mxu0
        %v1556 = vadd.f32 %v1533, %v1555
        %1557 = vdwg.mxu0
        %v1558 = vadd.f32 %v1323, %v1507
        %v1559 = vadd.f32 %v1369, %v1553
        %v1560 = vadd.f32 %v1326, %v1510
        %v1561 = vadd.f32 %v1372, %v1556
        %v1562 = vld [vmem:[%s7] sm:$0x3]
        %v1564 = vperm.slane %v1562, 0
        %v1565 = vperm.slane %v1562, 1
        %v1568 = vmul.f32 %v1558, %v1564
        %v1569 = vmul.f32 %v1559, %v1565
        %v1570 = vmul.f32 %v1560, %v1564
        %v1571 = vmul.f32 %v1561, %v1565
        %v1572 = vld [vmem:[#allocation13] sm:$0x3]
        %v1574 = vperm.slane %v1572, 0
        %v1575 = vperm.slane %v1572, 1
        %v1578 = vadd.f32 %v1568, %v1574
        %v1579 = vadd.f32 %v1569, %v1575
        %v1580 = vadd.f32 %v1570, %v1574
        %v1581 = vadd.f32 %v1571, %v1575
        %vm1582 = vcmp.gt.f32.partialorder %v1578, 0.0
        %vm1583 = vcmp.gt.f32.partialorder %v1579, 0.0
        %vm1584 = vcmp.gt.f32.partialorder %v1580, 0.0
        %vm1585 = vcmp.gt.f32.partialorder %v1581, 0.0
        %v1586 = vmul.f32 %v1578, 0.01
        %v1587 = vmul.f32 %v1579, 0.01
        %v1588 = vmul.f32 %v1580, 0.01
        %v1589 = vmul.f32 %v1581, 0.01
        %v1590 = vsel %vm1582, %v1578, %v1586
        %v1591 = vsel %vm1583, %v1579, %v1587
        %v1592 = vsel %vm1584, %v1580, %v1588
        %v1593 = vsel %vm1585, %v1581, %v1589
        %1594 = vst [vmem:[%s431] sm:$0xff] %v1590
        %1595 = vst [vmem:[%s431 + $0x8] sm:$0xff] %v1591
        %1596 = vst [vmem:[%s431 + $0x10] sm:$0xff] %v1592
        %1597 = vst [vmem:[%s431 + $0x18] sm:$0xff] %v1593
        %v1598 = vld [vmem:[%s444] sm:$0xff]
        %v1599 = vld [vmem:[%s444 + $0x8] sm:$0xff]
        %v1600 = vld [vmem:[%s444 + $0x10] sm:$0xff]
        %v1601 = vld [vmem:[%s444 + $0x18] sm:$0xff]
        %v1602 = vld [vmem:[#allocation12] sm:$0xff]
        %v1603 = vld [vmem:[#allocation12 + $0x8] sm:$0xff]
        %v1604 = vld [vmem:[#allocation12 + $0x10] sm:$0xff]
        %v1605 = vld [vmem:[#allocation12 + $0x18] sm:$0xff]
        %v1606 = vld [vmem:[#allocation12 + $0x20] sm:$0xff]
        %v1607 = vld [vmem:[#allocation12 + $0x28] sm:$0xff]
        %v1608 = vld [vmem:[#allocation12 + $0x30] sm:$0xff]
        %v1609 = vld [vmem:[#allocation12 + $0x38] sm:$0xff]
        %v1610 = vld [vmem:[#allocation12 + $0x40] sm:$0xff]
        %v1611 = vld [vmem:[#allocation12 + $0x48] sm:$0xff]
        %v1612 = vld [vmem:[#allocation12 + $0x50] sm:$0xff]
        %v1613 = vld [vmem:[#allocation12 + $0x58] sm:$0xff]
        %v1614 = vld [vmem:[#allocation12 + $0x60] sm:$0xff]
        %v1615 = vld [vmem:[#allocation12 + $0x68] sm:$0xff]
        %v1616 = vld [vmem:[#allocation12 + $0x70] sm:$0xff]
        %v1617 = vld [vmem:[#allocation12 + $0x78] sm:$0xff]
        %v1618 = vld [vmem:[#allocation12 + $0x80] sm:$0xff]
        %v1619 = vld [vmem:[#allocation12 + $0x88] sm:$0xff]
        %v1620 = vld [vmem:[#allocation12 + $0x90] sm:$0xff]
        %v1621 = vld [vmem:[#allocation12 + $0x98] sm:$0xff]
        %v1622 = vld [vmem:[#allocation12 + $0xa0] sm:$0xff]
        %v1623 = vld [vmem:[#allocation12 + $0xa8] sm:$0xff]
        %v1624 = vld [vmem:[#allocation12 + $0xb0] sm:$0xff]
        %v1625 = vld [vmem:[#allocation12 + $0xb8] sm:$0xff]
        %v1626 = vld [vmem:[#allocation12 + $0xc0] sm:$0xff]
        %v1627 = vld [vmem:[#allocation12 + $0xc8] sm:$0xff]
        %v1628 = vld [vmem:[#allocation12 + $0xd0] sm:$0xff]
        %v1629 = vld [vmem:[#allocation12 + $0xd8] sm:$0xff]
        %v1630 = vld [vmem:[#allocation12 + $0xe0] sm:$0xff]
        %v1631 = vld [vmem:[#allocation12 + $0xe8] sm:$0xff]
        %v1632 = vld [vmem:[#allocation12 + $0xf0] sm:$0xff]
        %v1633 = vld [vmem:[#allocation12 + $0xf8] sm:$0xff]
        %v1634 = vld [vmem:[#allocation12 + $0x100] sm:$0xff]
        %v1635 = vld [vmem:[#allocation12 + $0x108] sm:$0xff]
        %v1636 = vld [vmem:[#allocation12 + $0x110] sm:$0xff]
        %v1637 = vld [vmem:[#allocation12 + $0x118] sm:$0xff]
        %v1638 = vld [vmem:[#allocation12 + $0x120] sm:$0xff]
        %v1639 = vld [vmem:[#allocation12 + $0x128] sm:$0xff]
        %v1640 = vld [vmem:[#allocation12 + $0x130] sm:$0xff]
        %v1641 = vld [vmem:[#allocation12 + $0x138] sm:$0xff]
        %v1642 = vld [vmem:[#allocation12 + $0x140] sm:$0xff]
        %v1643 = vld [vmem:[#allocation12 + $0x148] sm:$0xff]
        %v1644 = vld [vmem:[#allocation12 + $0x150] sm:$0xff]
        %v1645 = vld [vmem:[#allocation12 + $0x158] sm:$0xff]
        %v1646 = vld [vmem:[#allocation12 + $0x160] sm:$0xff]
        %v1647 = vld [vmem:[#allocation12 + $0x168] sm:$0xff]
        %v1648 = vld [vmem:[#allocation12 + $0x170] sm:$0xff]
        %v1649 = vld [vmem:[#allocation12 + $0x178] sm:$0xff]
        %v1650 = vld [vmem:[#allocation12 + $0x180] sm:$0xff]
        %v1651 = vld [vmem:[#allocation12 + $0x188] sm:$0xff]
        %v1652 = vld [vmem:[#allocation12 + $0x190] sm:$0xff]
        %v1653 = vld [vmem:[#allocation12 + $0x198] sm:$0xff]
        %v1654 = vld [vmem:[#allocation12 + $0x1a0] sm:$0xff]
        %v1655 = vld [vmem:[#allocation12 + $0x1a8] sm:$0xff]
        %v1656 = vld [vmem:[#allocation12 + $0x1b0] sm:$0xff]
        %v1657 = vld [vmem:[#allocation12 + $0x1b8] sm:$0xff]
        %v1658 = vld [vmem:[#allocation12 + $0x1c0] sm:$0xff]
        %v1659 = vld [vmem:[#allocation12 + $0x1c8] sm:$0xff]
        %v1660 = vld [vmem:[#allocation12 + $0x1d0] sm:$0xff]
        %v1661 = vld [vmem:[#allocation12 + $0x1d8] sm:$0xff]
        %v1662 = vld [vmem:[#allocation12 + $0x1e0] sm:$0xff]
        %v1663 = vld [vmem:[#allocation12 + $0x1e8] sm:$0xff]
        %v1664 = vld [vmem:[#allocation12 + $0x1f0] sm:$0xff]
        %v1665 = vld [vmem:[#allocation12 + $0x1f8] sm:$0xff]
        %v1666 = vld [vmem:[#allocation3] sm:$0xfe]
        %v1667 = vld [vmem:[#allocation3 + $0x8] sm:$0xfe]
        %v1668 = vld [vmem:[#allocation3 + $0x10] sm:$0xff]
        %v1669 = vld [vmem:[#allocation3 + $0x18] sm:$0xff]
        %v1670 = vld [vmem:[#allocation3 + $0x20] sm:$0x1]
        %v1671 = vld [vmem:[#allocation3 + $0x28] sm:$0x1]
        %v1672 = vld [vmem:[%s1125] sm:$0xff]
        %v1673 = vld [vmem:[%s1125 + $0x8] sm:$0xff]
        %v1674 = vld [vmem:[%s1125 + $0x10] sm:$0xff]
        %v1675 = vld [vmem:[%s1125 + $0x18] sm:$0xff]
        %v1676 = vld [vmem:[%s1125 + $0x20] sm:$0xff]
        %v1677 = vld [vmem:[%s1125 + $0x28] sm:$0xff]
        %v1678 = vld [vmem:[%s1125 + $0x30] sm:$0xff]
        %v1679 = vld [vmem:[%s1125 + $0x38] sm:$0xff]
        %v1680 = vld [vmem:[%s1125 + $0x40] sm:$0xff]
        %v1681 = vld [vmem:[%s1125 + $0x48] sm:$0xff]
        %v1682 = vld [vmem:[%s1125 + $0x50] sm:$0xff]
        %v1683 = vld [vmem:[%s1125 + $0x58] sm:$0xff]
        %v1684 = vld [vmem:[%s1125 + $0x60] sm:$0xff]
        %v1685 = vld [vmem:[%s1125 + $0x68] sm:$0xff]
        %v1686 = vld [vmem:[%s1125 + $0x70] sm:$0xff]
        %v1687 = vld [vmem:[%s1125 + $0x78] sm:$0xff]
        %v1688 = vld [vmem:[%s1125 + $0x80] sm:$0xff]
        %v1689 = vld [vmem:[%s1125 + $0x88] sm:$0xff]
        %v1690 = vld [vmem:[%s1125 + $0x90] sm:$0xff]
        %v1691 = vld [vmem:[%s1125 + $0x98] sm:$0xff]
        %v1692 = vld [vmem:[%s1125 + $0xa0] sm:$0xff]
        %v1693 = vld [vmem:[%s1125 + $0xa8] sm:$0xff]
        %v1694 = vld [vmem:[%s1125 + $0xb0] sm:$0xff]
        %v1695 = vld [vmem:[%s1125 + $0xb8] sm:$0xff]
        %v1696 = vld [vmem:[%s1125 + $0xc0] sm:$0xff]
        %v1697 = vld [vmem:[%s1125 + $0xc8] sm:$0xff]
        %v1698 = vld [vmem:[%s1125 + $0xd0] sm:$0xff]
        %v1699 = vld [vmem:[%s1125 + $0xd8] sm:$0xff]
        %v1700 = vld [vmem:[%s1125 + $0xe0] sm:$0xff]
        %v1701 = vld [vmem:[%s1125 + $0xe8] sm:$0xff]
        %v1702 = vld [vmem:[%s1125 + $0xf0] sm:$0xff]
        %v1703 = vld [vmem:[%s1125 + $0xf8] sm:$0xff]
        %v1704 = vld [vmem:[%s1125 + $0x100] sm:$0xff]
        %v1705 = vld [vmem:[%s1125 + $0x108] sm:$0xff]
        %v1706 = vld [vmem:[%s1125 + $0x110] sm:$0xff]
        %v1707 = vld [vmem:[%s1125 + $0x118] sm:$0xff]
        %v1708 = vld [vmem:[%s1125 + $0x120] sm:$0xff]
        %v1709 = vld [vmem:[%s1125 + $0x128] sm:$0xff]
        %v1710 = vld [vmem:[%s1125 + $0x130] sm:$0xff]
        %v1711 = vld [vmem:[%s1125 + $0x138] sm:$0xff]
        %v1712 = vld [vmem:[%s1125 + $0x140] sm:$0xff]
        %v1713 = vld [vmem:[%s1125 + $0x148] sm:$0xff]
        %v1714 = vld [vmem:[%s1125 + $0x150] sm:$0xff]
        %v1715 = vld [vmem:[%s1125 + $0x158] sm:$0xff]
        %v1716 = vld [vmem:[%s1125 + $0x160] sm:$0xff]
        %v1717 = vld [vmem:[%s1125 + $0x168] sm:$0xff]
        %v1718 = vld [vmem:[%s1125 + $0x170] sm:$0xff]
        %v1719 = vld [vmem:[%s1125 + $0x178] sm:$0xff]
        %v1720 = vld [vmem:[%s1125 + $0x180] sm:$0xff]
        %v1721 = vld [vmem:[%s1125 + $0x188] sm:$0xff]
        %v1722 = vld [vmem:[%s1125 + $0x190] sm:$0xff]
        %v1723 = vld [vmem:[%s1125 + $0x198] sm:$0xff]
        %v1724 = vld [vmem:[%s1125 + $0x1a0] sm:$0xff]
        %v1725 = vld [vmem:[%s1125 + $0x1a8] sm:$0xff]
        %v1726 = vld [vmem:[%s1125 + $0x1b0] sm:$0xff]
        %v1727 = vld [vmem:[%s1125 + $0x1b8] sm:$0xff]
        %v1728 = vld [vmem:[%s1125 + $0x1c0] sm:$0xff]
        %v1729 = vld [vmem:[%s1125 + $0x1c8] sm:$0xff]
        %v1730 = vld [vmem:[%s1125 + $0x1d0] sm:$0xff]
        %v1731 = vld [vmem:[%s1125 + $0x1d8] sm:$0xff]
        %v1732 = vld [vmem:[%s1125 + $0x1e0] sm:$0xff]
        %v1733 = vld [vmem:[%s1125 + $0x1e8] sm:$0xff]
        %v1734 = vld [vmem:[%s1125 + $0x1f0] sm:$0xff]
        %v1735 = vld [vmem:[%s1125 + $0x1f8] sm:$0xff]
        %v1742 = vrot.slane %v1666, 1
        %v1743 = vrot.slane %v1668, 1
        %v1744 = vsel %vm1451, %v1742, %v1743
        %v1745 = vrot.slane %v1667, 1
        %v1746 = vrot.slane %v1669, 1
        %v1747 = vsel %vm1451, %v1745, %v1746
        %v1748 = vrot.slane %v1670, 1
        %v1749 = vsel %vm1451, %v1743, %v1748
        %v1750 = vrot.slane %v1671, 1
        %v1751 = vsel %vm1451, %v1746, %v1750
        %1756 = vmatpush.msra.mxu0 %v1702
        %1757 = vmatpush.msra.mxu0 %v1700
        %1758 = vmatpush.msra.mxu0 %v1698
        %1759 = vmatpush.msra.mxu0 %v1696
        %1760 = vmatpush.msra.mxu0 %v1694
        %1761 = vmatpush.msra.mxu0 %v1692
        %1762 = vmatpush.msra.mxu0 %v1690
        %1763 = vmatpush.msra.mxu0 %v1688
        %1764 = vmatpush.msra.mxu0 %v1686
        %1765 = vmatpush.msra.mxu0 %v1684
        %1766 = vmatpush.msra.mxu0 %v1682
        %1767 = vmatpush.msra.mxu0 %v1680
        %1768 = vmatpush.msra.mxu0 %v1678
        %1769 = vmatpush.msra.mxu0 %v1676
        %1770 = vmatpush.msra.mxu0 %v1674
        %1771 = vmatpush.msra.mxu0 %v1672
        %1772 = vmatmul.f32.gmra.mxu0 %v1744
        %v1773 = vpop.f32.mrf.mxu0
        %v1774 = vadd.f32 0.0, %v1773
        %1775 = vmatmul.f32.gmra.mxu0 %v1749
        %v1776 = vpop.f32.mrf.mxu0
        %v1777 = vadd.f32 0.0, %v1776
        %1778 = vdwg.mxu0
        %1779 = vmatpush.msra.mxu0 %v1734
        %1780 = vmatpush.msra.mxu0 %v1732
        %1781 = vmatpush.msra.mxu0 %v1730
        %1782 = vmatpush.msra.mxu0 %v1728
        %1783 = vmatpush.msra.mxu0 %v1726
        %1784 = vmatpush.msra.mxu0 %v1724
        %1785 = vmatpush.msra.mxu0 %v1722
        %1786 = vmatpush.msra.mxu0 %v1720
        %1787 = vmatpush.msra.mxu0 %v1718
        %1788 = vmatpush.msra.mxu0 %v1716
        %1789 = vmatpush.msra.mxu0 %v1714
        %1790 = vmatpush.msra.mxu0 %v1712
        %1791 = vmatpush.msra.mxu0 %v1710
        %1792 = vmatpush.msra.mxu0 %v1708
        %1793 = vmatpush.msra.mxu0 %v1706
        %1794 = vmatpush.msra.mxu0 %v1704
        %1795 = vmatmul.f32.gmra.mxu0 %v1747
        %v1796 = vpop.f32.mrf.mxu0
        %v1797 = vadd.f32 %v1774, %v1796
        %1798 = vmatmul.f32.gmra.mxu0 %v1751
        %v1799 = vpop.f32.mrf.mxu0
        %v1800 = vadd.f32 %v1777, %v1799
        %1801 = vdwg.mxu0
        %1802 = vmatpush.msra.mxu0 %v1703
        %1803 = vmatpush.msra.mxu0 %v1701
        %1804 = vmatpush.msra.mxu0 %v1699
        %1805 = vmatpush.msra.mxu0 %v1697
        %1806 = vmatpush.msra.mxu0 %v1695
        %1807 = vmatpush.msra.mxu0 %v1693
        %1808 = vmatpush.msra.mxu0 %v1691
        %1809 = vmatpush.msra.mxu0 %v1689
        %1810 = vmatpush.msra.mxu0 %v1687
        %1811 = vmatpush.msra.mxu0 %v1685
        %1812 = vmatpush.msra.mxu0 %v1683
        %1813 = vmatpush.msra.mxu0 %v1681
        %1814 = vmatpush.msra.mxu0 %v1679
        %1815 = vmatpush.msra.mxu0 %v1677
        %1816 = vmatpush.msra.mxu0 %v1675
        %1817 = vmatpush.msra.mxu0 %v1673
        %1818 = vmatmul.f32.gmra.mxu0 %v1744
        %v1819 = vpop.f32.mrf.mxu0
        %v1820 = vadd.f32 0.0, %v1819
        %1821 = vmatmul.f32.gmra.mxu0 %v1749
        %v1822 = vpop.f32.mrf.mxu0
        %v1823 = vadd.f32 0.0, %v1822
        %1824 = vdwg.mxu0
        %1825 = vmatpush.msra.mxu0 %v1735
        %1826 = vmatpush.msra.mxu0 %v1733
        %1827 = vmatpush.msra.mxu0 %v1731
        %1828 = vmatpush.msra.mxu0 %v1729
        %1829 = vmatpush.msra.mxu0 %v1727
        %1830 = vmatpush.msra.mxu0 %v1725
        %1831 = vmatpush.msra.mxu0 %v1723
        %1832 = vmatpush.msra.mxu0 %v1721
        %1833 = vmatpush.msra.mxu0 %v1719
        %1834 = vmatpush.msra.mxu0 %v1717
        %1835 = vmatpush.msra.mxu0 %v1715
        %1836 = vmatpush.msra.mxu0 %v1713
        %1837 = vmatpush.msra.mxu0 %v1711
        %1838 = vmatpush.msra.mxu0 %v1709
        %1839 = vmatpush.msra.mxu0 %v1707
        %1840 = vmatpush.msra.mxu0 %v1705
        %1841 = vmatmul.f32.gmra.mxu0 %v1747
        %v1842 = vpop.f32.mrf.mxu0
        %v1843 = vadd.f32 %v1820, %v1842
        %1844 = vmatmul.f32.gmra.mxu0 %v1751
        %v1845 = vpop.f32.mrf.mxu0
        %v1846 = vadd.f32 %v1823, %v1845
        %1847 = vdwg.mxu0
        %1848 = vmatpush.msra.mxu0 %v1632
        %1849 = vmatpush.msra.mxu0 %v1630
        %1850 = vmatpush.msra.mxu0 %v1628
        %1851 = vmatpush.msra.mxu0 %v1626
        %1852 = vmatpush.msra.mxu0 %v1624
        %1853 = vmatpush.msra.mxu0 %v1622
        %1854 = vmatpush.msra.mxu0 %v1620
        %1855 = vmatpush.msra.mxu0 %v1618
        %1856 = vmatpush.msra.mxu0 %v1616
        %1857 = vmatpush.msra.mxu0 %v1614
        %1858 = vmatpush.msra.mxu0 %v1612
        %1859 = vmatpush.msra.mxu0 %v1610
        %1860 = vmatpush.msra.mxu0 %v1608
        %1861 = vmatpush.msra.mxu0 %v1606
        %1862 = vmatpush.msra.mxu0 %v1604
        %1863 = vmatpush.msra.mxu0 %v1602
        %1864 = vmatmul.f32.gmra.mxu0 %v1598
        %v1865 = vpop.f32.mrf.mxu0
        %v1866 = vadd.f32 %v1797, %v1865
        %1867 = vmatmul.f32.gmra.mxu0 %v1600
        %v1868 = vpop.f32.mrf.mxu0
        %v1869 = vadd.f32 %v1800, %v1868
        %1870 = vdwg.mxu0
        %1871 = vmatpush.msra.mxu0 %v1664
        %1872 = vmatpush.msra.mxu0 %v1662
        %1873 = vmatpush.msra.mxu0 %v1660
        %1874 = vmatpush.msra.mxu0 %v1658
        %1875 = vmatpush.msra.mxu0 %v1656
        %1876 = vmatpush.msra.mxu0 %v1654
        %1877 = vmatpush.msra.mxu0 %v1652
        %1878 = vmatpush.msra.mxu0 %v1650
        %1879 = vmatpush.msra.mxu0 %v1648
        %1880 = vmatpush.msra.mxu0 %v1646
        %1881 = vmatpush.msra.mxu0 %v1644
        %1882 = vmatpush.msra.mxu0 %v1642
        %1883 = vmatpush.msra.mxu0 %v1640
        %1884 = vmatpush.msra.mxu0 %v1638
        %1885 = vmatpush.msra.mxu0 %v1636
        %1886 = vmatpush.msra.mxu0 %v1634
        %1887 = vmatmul.f32.gmra.mxu0 %v1599
        %v1888 = vpop.f32.mrf.mxu0
        %v1889 = vadd.f32 %v1866, %v1888
        %1890 = vmatmul.f32.gmra.mxu0 %v1601
        %v1891 = vpop.f32.mrf.mxu0
        %v1892 = vadd.f32 %v1869, %v1891
        %1893 = vdwg.mxu0
        %1894 = vmatpush.msra.mxu0 %v1633
        %1895 = vmatpush.msra.mxu0 %v1631
        %1896 = vmatpush.msra.mxu0 %v1629
        %1897 = vmatpush.msra.mxu0 %v1627
        %1898 = vmatpush.msra.mxu0 %v1625
        %1899 = vmatpush.msra.mxu0 %v1623
        %1900 = vmatpush.msra.mxu0 %v1621
        %1901 = vmatpush.msra.mxu0 %v1619
        %1902 = vmatpush.msra.mxu0 %v1617
        %1903 = vmatpush.msra.mxu0 %v1615
        %1904 = vmatpush.msra.mxu0 %v1613
        %1905 = vmatpush.msra.mxu0 %v1611
        %1906 = vmatpush.msra.mxu0 %v1609
        %1907 = vmatpush.msra.mxu0 %v1607
        %1908 = vmatpush.msra.mxu0 %v1605
        %1909 = vmatpush.msra.mxu0 %v1603
        %1910 = vmatmul.f32.gmra.mxu0 %v1598
        %v1911 = vpop.f32.mrf.mxu0
        %v1912 = vadd.f32 %v1843, %v1911
        %1913 = vmatmul.f32.gmra.mxu0 %v1600
        %v1914 = vpop.f32.mrf.mxu0
        %v1915 = vadd.f32 %v1846, %v1914
        %1916 = vdwg.mxu0
        %1917 = vmatpush.msra.mxu0 %v1665
        %1918 = vmatpush.msra.mxu0 %v1663
        %1919 = vmatpush.msra.mxu0 %v1661
        %1920 = vmatpush.msra.mxu0 %v1659
        %1921 = vmatpush.msra.mxu0 %v1657
        %1922 = vmatpush.msra.mxu0 %v1655
        %1923 = vmatpush.msra.mxu0 %v1653
        %1924 = vmatpush.msra.mxu0 %v1651
        %1925 = vmatpush.msra.mxu0 %v1649
        %1926 = vmatpush.msra.mxu0 %v1647
        %1927 = vmatpush.msra.mxu0 %v1645
        %1928 = vmatpush.msra.mxu0 %v1643
        %1929 = vmatpush.msra.mxu0 %v1641
        %1930 = vmatpush.msra.mxu0 %v1639
        %1931 = vmatpush.msra.mxu0 %v1637
        %1932 = vmatpush.msra.mxu0 %v1635
        %1933 = vmatmul.f32.gmra.mxu0 %v1599
        %v1934 = vpop.f32.mrf.mxu0
        %v1935 = vadd.f32 %v1912, %v1934
        %1936 = vmatmul.f32.gmra.mxu0 %v1601
        %v1937 = vpop.f32.mrf.mxu0
        %v1938 = vadd.f32 %v1915, %v1937
        %1939 = vdwg.mxu0
        %v1940 = vld [vmem:[%s444] sm:$0xfe]
        %v1941 = vld [vmem:[%s444 + $0x8] sm:$0xfe]
        %v1942 = vld [vmem:[%s444 + $0x10] sm:$0xff]
        %v1943 = vld [vmem:[%s444 + $0x18] sm:$0xff]
        %v1944 = vld [vmem:[%s444 + $0x20] sm:$0x1]
        %v1945 = vld [vmem:[%s444 + $0x28] sm:$0x1]
        %v1946 = vld [vmem:[%s1380] sm:$0xff]
        %v1947 = vld [vmem:[%s1380 + $0x8] sm:$0xff]
        %v1948 = vld [vmem:[%s1380 + $0x10] sm:$0xff]
        %v1949 = vld [vmem:[%s1380 + $0x18] sm:$0xff]
        %v1950 = vld [vmem:[%s1380 + $0x20] sm:$0xff]
        %v1951 = vld [vmem:[%s1380 + $0x28] sm:$0xff]
        %v1952 = vld [vmem:[%s1380 + $0x30] sm:$0xff]
        %v1953 = vld [vmem:[%s1380 + $0x38] sm:$0xff]
        %v1954 = vld [vmem:[%s1380 + $0x40] sm:$0xff]
        %v1955 = vld [vmem:[%s1380 + $0x48] sm:$0xff]
        %v1956 = vld [vmem:[%s1380 + $0x50] sm:$0xff]
        %v1957 = vld [vmem:[%s1380 + $0x58] sm:$0xff]
        %v1958 = vld [vmem:[%s1380 + $0x60] sm:$0xff]
        %v1959 = vld [vmem:[%s1380 + $0x68] sm:$0xff]
        %v1960 = vld [vmem:[%s1380 + $0x70] sm:$0xff]
        %v1961 = vld [vmem:[%s1380 + $0x78] sm:$0xff]
        %v1962 = vld [vmem:[%s1380 + $0x80] sm:$0xff]
        %v1963 = vld [vmem:[%s1380 + $0x88] sm:$0xff]
        %v1964 = vld [vmem:[%s1380 + $0x90] sm:$0xff]
        %v1965 = vld [vmem:[%s1380 + $0x98] sm:$0xff]
        %v1966 = vld [vmem:[%s1380 + $0xa0] sm:$0xff]
        %v1967 = vld [vmem:[%s1380 + $0xa8] sm:$0xff]
        %v1968 = vld [vmem:[%s1380 + $0xb0] sm:$0xff]
        %v1969 = vld [vmem:[%s1380 + $0xb8] sm:$0xff]
        %v1970 = vld [vmem:[%s1380 + $0xc0] sm:$0xff]
        %v1971 = vld [vmem:[%s1380 + $0xc8] sm:$0xff]
        %v1972 = vld [vmem:[%s1380 + $0xd0] sm:$0xff]
        %v1973 = vld [vmem:[%s1380 + $0xd8] sm:$0xff]
        %v1974 = vld [vmem:[%s1380 + $0xe0] sm:$0xff]
        %v1975 = vld [vmem:[%s1380 + $0xe8] sm:$0xff]
        %v1976 = vld [vmem:[%s1380 + $0xf0] sm:$0xff]
        %v1977 = vld [vmem:[%s1380 + $0xf8] sm:$0xff]
        %v1978 = vld [vmem:[%s1380 + $0x100] sm:$0xff]
        %v1979 = vld [vmem:[%s1380 + $0x108] sm:$0xff]
        %v1980 = vld [vmem:[%s1380 + $0x110] sm:$0xff]
        %v1981 = vld [vmem:[%s1380 + $0x118] sm:$0xff]
        %v1982 = vld [vmem:[%s1380 + $0x120] sm:$0xff]
        %v1983 = vld [vmem:[%s1380 + $0x128] sm:$0xff]
        %v1984 = vld [vmem:[%s1380 + $0x130] sm:$0xff]
        %v1985 = vld [vmem:[%s1380 + $0x138] sm:$0xff]
        %v1986 = vld [vmem:[%s1380 + $0x140] sm:$0xff]
        %v1987 = vld [vmem:[%s1380 + $0x148] sm:$0xff]
        %v1988 = vld [vmem:[%s1380 + $0x150] sm:$0xff]
        %v1989 = vld [vmem:[%s1380 + $0x158] sm:$0xff]
        %v1990 = vld [vmem:[%s1380 + $0x160] sm:$0xff]
        %v1991 = vld [vmem:[%s1380 + $0x168] sm:$0xff]
        %v1992 = vld [vmem:[%s1380 + $0x170] sm:$0xff]
        %v1993 = vld [vmem:[%s1380 + $0x178] sm:$0xff]
        %v1994 = vld [vmem:[%s1380 + $0x180] sm:$0xff]
        %v1995 = vld [vmem:[%s1380 + $0x188] sm:$0xff]
        %v1996 = vld [vmem:[%s1380 + $0x190] sm:$0xff]
        %v1997 = vld [vmem:[%s1380 + $0x198] sm:$0xff]
        %v1998 = vld [vmem:[%s1380 + $0x1a0] sm:$0xff]
        %v1999 = vld [vmem:[%s1380 + $0x1a8] sm:$0xff]
        %v2000 = vld [vmem:[%s1380 + $0x1b0] sm:$0xff]
        %v2001 = vld [vmem:[%s1380 + $0x1b8] sm:$0xff]
        %v2002 = vld [vmem:[%s1380 + $0x1c0] sm:$0xff]
        %v2003 = vld [vmem:[%s1380 + $0x1c8] sm:$0xff]
        %v2004 = vld [vmem:[%s1380 + $0x1d0] sm:$0xff]
        %v2005 = vld [vmem:[%s1380 + $0x1d8] sm:$0xff]
        %v2006 = vld [vmem:[%s1380 + $0x1e0] sm:$0xff]
        %v2007 = vld [vmem:[%s1380 + $0x1e8] sm:$0xff]
        %v2008 = vld [vmem:[%s1380 + $0x1f0] sm:$0xff]
        %v2009 = vld [vmem:[%s1380 + $0x1f8] sm:$0xff]
        %v2016 = vrot.slane %v1940, 1
        %v2017 = vrot.slane %v1942, 1
        %v2018 = vsel %vm1451, %v2016, %v2017
        %v2019 = vrot.slane %v1941, 1
        %v2020 = vrot.slane %v1943, 1
        %v2021 = vsel %vm1451, %v2019, %v2020
        %v2022 = vrot.slane %v1944, 1
        %v2023 = vsel %vm1451, %v2017, %v2022
        %v2024 = vrot.slane %v1945, 1
        %v2025 = vsel %vm1451, %v2020, %v2024
        %2030 = vmatpush.msra.mxu0 %v1976
        %2031 = vmatpush.msra.mxu0 %v1974
        %2032 = vmatpush.msra.mxu0 %v1972
        %2033 = vmatpush.msra.mxu0 %v1970
        %2034 = vmatpush.msra.mxu0 %v1968
        %2035 = vmatpush.msra.mxu0 %v1966
        %2036 = vmatpush.msra.mxu0 %v1964
        %2037 = vmatpush.msra.mxu0 %v1962
        %2038 = vmatpush.msra.mxu0 %v1960
        %2039 = vmatpush.msra.mxu0 %v1958
        %2040 = vmatpush.msra.mxu0 %v1956
        %2041 = vmatpush.msra.mxu0 %v1954
        %2042 = vmatpush.msra.mxu0 %v1952
        %2043 = vmatpush.msra.mxu0 %v1950
        %2044 = vmatpush.msra.mxu0 %v1948
        %2045 = vmatpush.msra.mxu0 %v1946
        %2046 = vmatmul.f32.gmra.mxu0 %v2018
        %v2047 = vpop.f32.mrf.mxu0
        %v2048 = vadd.f32 0.0, %v2047
        %2049 = vmatmul.f32.gmra.mxu0 %v2023
        %v2050 = vpop.f32.mrf.mxu0
        %v2051 = vadd.f32 0.0, %v2050
        %2052 = vdwg.mxu0
        %2053 = vmatpush.msra.mxu0 %v2008
        %2054 = vmatpush.msra.mxu0 %v2006
        %2055 = vmatpush.msra.mxu0 %v2004
        %2056 = vmatpush.msra.mxu0 %v2002
        %2057 = vmatpush.msra.mxu0 %v2000
        %2058 = vmatpush.msra.mxu0 %v1998
        %2059 = vmatpush.msra.mxu0 %v1996
        %2060 = vmatpush.msra.mxu0 %v1994
        %2061 = vmatpush.msra.mxu0 %v1992
        %2062 = vmatpush.msra.mxu0 %v1990
        %2063 = vmatpush.msra.mxu0 %v1988
        %2064 = vmatpush.msra.mxu0 %v1986
        %2065 = vmatpush.msra.mxu0 %v1984
        %2066 = vmatpush.msra.mxu0 %v1982
        %2067 = vmatpush.msra.mxu0 %v1980
        %2068 = vmatpush.msra.mxu0 %v1978
        %2069 = vmatmul.f32.gmra.mxu0 %v2021
        %v2070 = vpop.f32.mrf.mxu0
        %v2071 = vadd.f32 %v2048, %v2070
        %2072 = vmatmul.f32.gmra.mxu0 %v2025
        %v2073 = vpop.f32.mrf.mxu0
        %v2074 = vadd.f32 %v2051, %v2073
        %2075 = vdwg.mxu0
        %2076 = vmatpush.msra.mxu0 %v1977
        %2077 = vmatpush.msra.mxu0 %v1975
        %2078 = vmatpush.msra.mxu0 %v1973
        %2079 = vmatpush.msra.mxu0 %v1971
        %2080 = vmatpush.msra.mxu0 %v1969
        %2081 = vmatpush.msra.mxu0 %v1967
        %2082 = vmatpush.msra.mxu0 %v1965
        %2083 = vmatpush.msra.mxu0 %v1963
        %2084 = vmatpush.msra.mxu0 %v1961
        %2085 = vmatpush.msra.mxu0 %v1959
        %2086 = vmatpush.msra.mxu0 %v1957
        %2087 = vmatpush.msra.mxu0 %v1955
        %2088 = vmatpush.msra.mxu0 %v1953
        %2089 = vmatpush.msra.mxu0 %v1951
        %2090 = vmatpush.msra.mxu0 %v1949
        %2091 = vmatpush.msra.mxu0 %v1947
        %2092 = vmatmul.f32.gmra.mxu0 %v2018
        %v2093 = vpop.f32.mrf.mxu0
        %v2094 = vadd.f32 0.0, %v2093
        %2095 = vmatmul.f32.gmra.mxu0 %v2023
        %v2096 = vpop.f32.mrf.mxu0
        %v2097 = vadd.f32 0.0, %v2096
        %2098 = vdwg.mxu0
        %2099 = vmatpush.msra.mxu0 %v2009
        %2100 = vmatpush.msra.mxu0 %v2007
        %2101 = vmatpush.msra.mxu0 %v2005
        %2102 = vmatpush.msra.mxu0 %v2003
        %2103 = vmatpush.msra.mxu0 %v2001
        %2104 = vmatpush.msra.mxu0 %v1999
        %2105 = vmatpush.msra.mxu0 %v1997
        %2106 = vmatpush.msra.mxu0 %v1995
        %2107 = vmatpush.msra.mxu0 %v1993
        %2108 = vmatpush.msra.mxu0 %v1991
        %2109 = vmatpush.msra.mxu0 %v1989
        %2110 = vmatpush.msra.mxu0 %v1987
        %2111 = vmatpush.msra.mxu0 %v1985
        %2112 = vmatpush.msra.mxu0 %v1983
        %2113 = vmatpush.msra.mxu0 %v1981
        %2114 = vmatpush.msra.mxu0 %v1979
        %2115 = vmatmul.f32.gmra.mxu0 %v2021
        %v2116 = vpop.f32.mrf.mxu0
        %v2117 = vadd.f32 %v2094, %v2116
        %2118 = vmatmul.f32.gmra.mxu0 %v2025
        %v2119 = vpop.f32.mrf.mxu0
        %v2120 = vadd.f32 %v2097, %v2119
        %2121 = vdwg.mxu0
        %v2122 = vadd.f32 %v1889, %v2071
        %v2123 = vadd.f32 %v1935, %v2117
        %v2124 = vadd.f32 %v1892, %v2074
        %v2125 = vadd.f32 %v1938, %v2120
        %v2126 = vld [vmem:[%s7] sm:$0x3]
        %v2128 = vperm.slane %v2126, 0
        %v2129 = vperm.slane %v2126, 1
        %v2132 = vmul.f32 %v2122, %v2128
        %v2133 = vmul.f32 %v2123, %v2129
        %v2134 = vmul.f32 %v2124, %v2128
        %v2135 = vmul.f32 %v2125, %v2129
        %v2136 = vld [vmem:[#allocation13] sm:$0x3]
        %v2138 = vperm.slane %v2136, 0
        %v2139 = vperm.slane %v2136, 1
        %v2142 = vadd.f32 %v2132, %v2138
        %v2143 = vadd.f32 %v2133, %v2139
        %v2144 = vadd.f32 %v2134, %v2138
        %v2145 = vadd.f32 %v2135, %v2139
        %vm2146 = vcmp.gt.f32.partialorder %v2142, 0.0
        %vm2147 = vcmp.gt.f32.partialorder %v2143, 0.0
        %vm2148 = vcmp.gt.f32.partialorder %v2144, 0.0
        %vm2149 = vcmp.gt.f32.partialorder %v2145, 0.0
        %v2150 = vmul.f32 %v2142, 0.01
        %v2151 = vmul.f32 %v2143, 0.01
        %v2152 = vmul.f32 %v2144, 0.01
        %v2153 = vmul.f32 %v2145, 0.01
        %v2154 = vsel %vm2146, %v2142, %v2150
        %v2155 = vsel %vm2147, %v2143, %v2151
        %v2156 = vsel %vm2148, %v2144, %v2152
        %v2157 = vsel %vm2149, %v2145, %v2153
        %s2158 = scalar_lea.vmem %s431, 32 [#allocation15]
        %2159 = vst [vmem:[%s2158] sm:$0xff] %v2154
        %2160 = vst [vmem:[%s2158 + $0x8] sm:$0xff] %v2155
        %2161 = vst [vmem:[%s2158 + $0x10] sm:$0xff] %v2156
        %2162 = vst [vmem:[%s2158 + $0x18] sm:$0xff] %v2157
        %s2163 = sand.u32 %s231, 1
        %s2164 = scalar_lea.sflag [#allocation6], %s2163
        %s2165 = sand.u32 %s231, 1
        %s2166 = smul.addr %s2165, 64
        %s2167 = scalar_lea.vmem [#allocation15], %s2166
        // Predicated region
        $region81: #{tpu_custom_call.1} parent=55 // pred_check
          %p2168 = pneg %p241
        $region82: #{tpu_custom_call.1} parent=55 // pred_check_branch
          %2170 = sbr.rel (%p2168) target = $region84
        $region83: #{tpu_custom_call.1} parent=55 // pred_region
          #allocation17 [shape = 'u32[6]{0}', space=smem, size = 0x18, scoped, tag = 'DMA stride descriptor']
          %s2171 = smul.u32 2, %s29
          %2173 = vsyncadd %s2164, 0
          %s2174 = smul.addr %s2171, 2
          %s2175 = smul.addr %s2174, 8
          %s2176 = scalar_lea.hbm %s9, %s2175
          %s2178 = sshll.u32 1, 14
          %s2179 = sxor.u32 4294967295, %s2178
          %s2182 = sshll.u32 7, 18
          %s2183 = sxor.u32 4294967295, %s2182
          %s2184 = sand.u32 0, %s2183
          %s2186 = sor.u32 %s2184, 0
          %s2187 = sshll.u32 %s2167, 4
          %s2188 = int_to_ptr.vmem [resolvable:$true] %s2187
          %s2189 = sshll.u32 %s2176, 4
          %s2190 = int_to_ptr.hbm [resolvable:$true] %s2189
          %2196 = sst [smem:[#allocation17]] 512
          %s2197 = scalar_lea.smem [#allocation17], 1
          %2198 = sst [smem:[%s2197]] 1024
          %s2199 = scalar_lea.smem [#allocation17], 2
          %2200 = sst [smem:[%s2199]] 2
          %s2201 = scalar_lea.smem [#allocation17], 3
          %2202 = sst [smem:[%s2201]] 256
          %s2203 = scalar_lea.smem [#allocation17], 4
          %2204 = sst [smem:[%s2203]] 256
          %s2205 = scalar_lea.smem [#allocation17], 5
          %2206 = sst [smem:[%s2205]] 16
          %2208 = dma.general %s2188, 1024, %s2190, %s2164, [#allocation16], [#allocation17], %s2186, 0
        $region84: #{tpu_custom_call.1} parent=55 // pred_fallthru
          _
      $region56: #{tpu_custom_call.1} parent=5 // pred_fallthru
        _
      %p2209 = scmp.le.s32.totalorder 2, %s24
      // Predicated region
      $region85: #{tpu_custom_call.1} parent=5 // pred_check
        %p2210 = pneg %p2209
      $region86: #{tpu_custom_call.1} parent=5 // pred_check_branch
        %2212 = sbr.rel (%p2210) target = $region88
      $region87: #{tpu_custom_call.1} parent=5 // pred_region
        %s2213 = ssub.s32 %s24, 2
        // Predicated region
        $region89: #{tpu_custom_call.1} parent=87 // pred_check
          %p2214 = pneg %p247
        $region90: #{tpu_custom_call.1} parent=87 // pred_check_branch
          %2216 = sbr.rel (%p2214) target = $region92
        $region91: #{tpu_custom_call.1} parent=87 // pred_region
          %s2217 = sand.u32 %s232, 1
          %s2218 = scalar_lea.sflag [#allocation6], %s2217
          %s2219 = sand.u32 %s232, 1
          %s2220 = smul.addr %s2219, 64
          %s2221 = scalar_lea.vmem [#allocation15], %s2220
          %2223 = dma.done %s2218, 1024
        $region92: #{tpu_custom_call.1} parent=87 // pred_fallthru
          _
      $region88: #{tpu_custom_call.1} parent=5 // pred_fallthru
        _
    $region6: #{tpu_custom_call.1} parent=1 // loop_footer
      %s28 = sadd.s32 1, %s24
    $region7: #{tpu_custom_call.1} parent=1 // loop_footer_branch
      %23 = sbr.rel target = $region3
    $region8: #{tpu_custom_call.1} parent=1 // loop_exit
      _
    %2224 = vsyncpa [#allocation5], 1
    %s2225 = scalar_lea.sflag [#allocation5], 1
    %2226 = vsyncpa %s2225, 1
    %2227 = vsyncpa [#allocation8], 1
    %2228 = vsyncpa [#allocation11], 1
    %2229 = vsyncpa [#allocation14], 1
    %2230 = vsyncpa [#allocation6], 1
    %s2231 = scalar_lea.sflag [#allocation6], 1
    %2232 = vsyncpa %s2231, 1

</llo_original>
